<compile_context>
chip_gen: v7x
topology: tpu7x:2x2x1
jax: 0.10.0
libtpu: 0.0.40
codegen_flags: <defaults>
</compile_context>

<pallas_src>
import jax
import jax.numpy as jnp
from jax.experimental import pallas as pl
from jax.experimental.pallas import tpu as pltpu


def attention_kernel(h_ref, w_ref, enc_ref, mask_ref, out_ref):
    # h_ref    : (tb, D)      hidden (f32 or bf16)
    # w_ref    : (D, E)       attention weight, fetched once (constant index_map)
    # enc_ref  : (tb, S, E)   encoder outputs, native dtype (f32 or bf16)
    # mask_ref : (tb, S)      int32, nonzero => masked
    # out_ref  : (tb, S)      f32 attention weights
    tb, S, E = enc_ref.shape

    # v = hidden @ W on the MXU, f32 accumulation: (tb, D) @ (D, E) -> (tb, E).
    v = jnp.dot(h_ref[...].astype(jnp.float32),
                w_ref[...].astype(jnp.float32),
                preferred_element_type=jnp.float32)

    # scores[b, s] = sum_e enc[b, s, e] * v[b, e].
    # Accumulate over static, lane-aligned E-chunks so the live f32 (tb, S, EC)
    # product stays small (bounded vreg pressure at large tb).  Chunk offsets
    # are Python ints -> zero-cost static ref views.
    if E % 256 == 0:
        ec = 256
    elif E % 128 == 0:
        ec = 128
    else:
        ec = E
    scores = jnp.zeros((tb, S), dtype=jnp.float32)
    for off in range(0, E, ec):
        enc_c = enc_ref[:, :, off:off + ec].astype(jnp.float32)   # (tb, S, ec)
        v_c = v[:, off:off + ec][:, None, :]                      # (tb, 1, ec)
        scores = scores + jnp.sum(enc_c * v_c, axis=-1)

    # masked_fill_(mask, -inf).  Fully-masked rows produce NaN, matching the
    # PyTorch masked_fill(-inf) + softmax reference behavior.
    scores = jnp.where(mask_ref[...] != 0, -jnp.inf, scores)

    # Softmax over src_len in f32; normalization via the EUP reciprocal.
    m = jnp.max(scores, axis=-1, keepdims=True)
    e = jnp.exp(scores - m)
    denom = jnp.sum(e, axis=-1, keepdims=True)
    out_ref[...] = e * pl.reciprocal(denom, approx=True)


def attention_forward(hidden, enc_output, mask, w, *, tb=None):
    """hidden [B,D], enc_output [B,S,E] (f32 or bf16), mask [B,S] bool, w [D,E] -> [B,S] f32."""
    B, S, E = enc_output.shape
    D = hidden.shape[1]
    assert w.shape == (D, E)
    assert mask.shape == (B, S)

    if tb is None:
        # One big tile for small B (grid=(1,)); ~64-row tiles for large B so the
        # per-step DMA work dominates the ~0.35 us fixed per-step overhead.
        # v7x: pass tb = pl.cdiv(B, 2) (grid length 2) to use both TensorCores.
        tb = B if B <= 64 else 64
    tb = max(1, min(tb, B))
    if tb != B and tb % 8 != 0:
        # Sublane rule: second-minor block dims must be a multiple of 8 or the
        # full array extent.
        tb = min(B, ((tb + 7) // 8) * 8)
    grid_b = pl.cdiv(B, tb)   # no jnp.pad: the trailing partial block reads
                              # don't-care rows and its writeback is masked.

    mask_i = mask.astype(jnp.int32)

    # VMEM: per step ~ 2*tb*S*E*itemsize(enc) + 2*D*E*4 (W) + small; comfortably
    # under the 32 MiB default scoped limit at these shapes on v5e/v6e/v7x.
    # TODO(synk): for long S, tile S with an online softmax (running max/denom in
    # VMEM scratch) and budget the double-buffered enc tile against v7x's 64 MiB
    # VMEM via pltpu.CompilerParams(vmem_limit_bytes=...).

    return pl.pallas_call(
        attention_kernel,
        out_shape=jax.ShapeDtypeStruct((B, S), jnp.float32),
        grid_spec=pltpu.PrefetchScalarGridSpec(
            num_scalar_prefetch=0,
            grid=(grid_b,),
            in_specs=[
                pl.BlockSpec((tb, D), lambda b: (b, 0)),        # hidden
                pl.BlockSpec((D, E), lambda b: (0, 0)),         # W: constant block -> fetched once
                pl.BlockSpec((tb, S, E), lambda b: (b, 0, 0)),  # enc_output (native dtype)
                pl.BlockSpec((tb, S), lambda b: (b, 0)),        # mask
            ],
            # At S >= 128, keep the output last dim a multiple of 128 for
            # lane-dense (unmasked) stores; at S = 8 the masked store is noise.
            out_specs=pl.BlockSpec((tb, S), lambda b: (b, 0)),
        ),
        compiler_params=pltpu.CompilerParams(
            dimension_semantics=("parallel",)),
    )(hidden, w, enc_output, mask_i)


def attention_reference(hidden, enc_output, mask, w):
    # Literal translation of the PyTorch forward (f32, high-precision matmul).
    proj = jnp.einsum("bse,de->bsd", enc_output.astype(jnp.float32),
                      w.astype(jnp.float32),
                      precision=jax.lax.Precision.HIGHEST)        # self.attn(enc_output)
    scores = jnp.sum(hidden.astype(jnp.float32)[:, None, :] * proj, axis=2)
    scores = jnp.where(mask, -jnp.inf, scores)
    return jax.nn.softmax(scores, axis=1)


if __name__ == "__main__":
    # Shapes consistent with the module (batch_size=16, enc_hid=1024, dec_hid=300),
    # with a small src_len.
    B, S = 16, 8
    E, D = 1024, 300

    key = jax.random.PRNGKey(0)
    k_h, k_e, k_w = jax.random.split(key, 3)

    hidden = jax.random.normal(k_h, (B, D), dtype=jnp.float32)
    enc_output = jax.random.normal(k_e, (B, S, E), dtype=jnp.float32)

    # Deterministic nn.Linear(enc_hid, dec_hid, bias=False) weight: [D, E].
    bound = 1.0 / (E ** 0.5)
    w = jax.random.uniform(k_w, (D, E), dtype=jnp.float32, minval=-bound, maxval=bound)

    # Padding-style mask: True => masked; every row keeps at least one valid position.
    lengths = jnp.arange(B, dtype=jnp.int32) % S + 1
    mask = jnp.arange(S)[None, :] >= lengths[:, None]              # [B, S] bool

    # f32-streaming path (default tb -> grid=(1,) here).
    out = jax.block_until_ready(attention_forward(hidden, enc_output, mask, w))
    ref = attention_reference(hidden, enc_output, mask, w)
    assert out.shape == (B, S)
    assert jnp.allclose(out, ref, rtol=2e-3, atol=2e-3), "f32 mismatch vs reference"

    # bf16-streaming path: enc_output is the only large tensor; the kernel is
    # dtype-agnostic and upcasts to f32 internally (halves HBM traffic).
    enc_bf16 = enc_output.astype(jnp.bfloat16)
    out_bf16 = jax.block_until_ready(attention_forward(hidden, enc_bf16, mask, w))
    ref_bf16 = attention_reference(hidden, enc_bf16, mask, w)
    assert jnp.allclose(out_bf16, ref_bf16, rtol=2e-3, atol=2e-3), "bf16 mismatch vs reference"

    print("KERNEL_OK")
</pallas_src>

<mosaic_0001>
module attributes {stable_mosaic.version = 11 : i64} {
  func.func @attention_kernel(%arg0: i32, %arg1: memref<16x300xf32, #tpu.memory_space<vmem>>, %arg2: memref<300x1024xf32, #tpu.memory_space<vmem>>, %arg3: memref<16x8x1024xf32, #tpu.memory_space<vmem>>, %arg4: memref<16x8xi32, #tpu.memory_space<vmem>>, %arg5: memref<16x8xf32, #tpu.memory_space<vmem>>) attributes {dimension_semantics = [#tpu.dimension_semantics<parallel>], iteration_bounds = array<i64: 1>, scalar_prefetch = 0 : i64, scratch_operands = 0 : i64, tpu.core_type = #tpu.core_type<tc>, window_params = [{transform_indices = @transform_0, window_bounds = array<i64: 16, 300>}, {pipeline_mode = #tpu.pipeline_mode<synchronous>, transform_indices = @transform_1, window_bounds = array<i64: 300, 1024>}, {transform_indices = @transform_2, window_bounds = array<i64: 16, 8, 1024>}, {transform_indices = @transform_3, window_bounds = array<i64: 16, 8>}, {transform_indices = @transform_4, window_bounds = array<i64: 16, 8>}]} {
    %c0 = arith.constant 0 : index
    %c0_0 = arith.constant 0 : index
    %0 = vector.load %arg1[%c0, %c0_0] : memref<16x300xf32, #tpu.memory_space<vmem>>, vector<16x300xf32>
    %c0_1 = arith.constant 0 : index
    %c0_2 = arith.constant 0 : index
    %1 = vector.load %arg2[%c0_1, %c0_2] : memref<300x1024xf32, #tpu.memory_space<vmem>>, vector<300x1024xf32>
    %cst = arith.constant dense<0.000000e+00> : vector<16x1024xf32>
    %2 = tpu.matmul %0, %1, %cst {dimension_numbers = #tpu.dot_dimension_numbers<[1], [0], [0], [1], [0, 0, 1, 1], [], []>} : vector<16x300xf32>, vector<300x1024xf32>, vector<16x1024xf32> -> vector<16x1024xf32>
    %cst_3 = arith.constant 0.000000e+00 : f32
    %3 = vector.broadcast %cst_3 : f32 to vector<16x8xf32>
    %c0_4 = arith.constant 0 : index
    %c0_5 = arith.constant 0 : index
    %c0_6 = arith.constant 0 : index
    %4 = vector.load %arg3[%c0_4, %c0_5, %c0_6] : memref<16x8x1024xf32, #tpu.memory_space<vmem>>, vector<16x8x256xf32>
    %5 = vector.extract_strided_slice %2 {offsets = [0, 0], sizes = [16, 256], strides = [1, 1]} : vector<16x1024xf32> to vector<16x256xf32>
    %6 = vector.shape_cast %5 : vector<16x256xf32> to vector<16x1x256xf32>
    %7 = vector.broadcast %6 : vector<16x1x256xf32> to vector<16x8x256xf32>
    %8 = arith.mulf %4, %7 : vector<16x8x256xf32>
    %cst_7 = arith.constant dense<0.000000e+00> : vector<16x8xf32>
    %9 = vector.multi_reduction <add>, %8, %cst_7 [2] : vector<16x8x256xf32> to vector<16x8xf32>
    %10 = arith.addf %3, %9 : vector<16x8xf32>
    %c0_8 = arith.constant 0 : index
    %c0_9 = arith.constant 0 : index
    %c256 = arith.constant 256 : index
    %11 = vector.load %arg3[%c0_8, %c0_9, %c256] : memref<16x8x1024xf32, #tpu.memory_space<vmem>>, vector<16x8x256xf32>
    %12 = vector.extract_strided_slice %2 {offsets = [0, 256], sizes = [16, 256], strides = [1, 1]} : vector<16x1024xf32> to vector<16x256xf32>
    %13 = vector.shape_cast %12 : vector<16x256xf32> to vector<16x1x256xf32>
    %14 = vector.broadcast %13 : vector<16x1x256xf32> to vector<16x8x256xf32>
    %15 = arith.mulf %11, %14 : vector<16x8x256xf32>
    %cst_10 = arith.constant dense<0.000000e+00> : vector<16x8xf32>
    %16 = vector.multi_reduction <add>, %15, %cst_10 [2] : vector<16x8x256xf32> to vector<16x8xf32>
    %17 = arith.addf %10, %16 : vector<16x8xf32>
    %c0_11 = arith.constant 0 : index
    %c0_12 = arith.constant 0 : index
    %c512 = arith.constant 512 : index
    %18 = vector.load %arg3[%c0_11, %c0_12, %c512] : memref<16x8x1024xf32, #tpu.memory_space<vmem>>, vector<16x8x256xf32>
    %19 = vector.extract_strided_slice %2 {offsets = [0, 512], sizes = [16, 256], strides = [1, 1]} : vector<16x1024xf32> to vector<16x256xf32>
    %20 = vector.shape_cast %19 : vector<16x256xf32> to vector<16x1x256xf32>
    %21 = vector.broadcast %20 : vector<16x1x256xf32> to vector<16x8x256xf32>
    %22 = arith.mulf %18, %21 : vector<16x8x256xf32>
    %cst_13 = arith.constant dense<0.000000e+00> : vector<16x8xf32>
    %23 = vector.multi_reduction <add>, %22, %cst_13 [2] : vector<16x8x256xf32> to vector<16x8xf32>
    %24 = arith.addf %17, %23 : vector<16x8xf32>
    %c0_14 = arith.constant 0 : index
    %c0_15 = arith.constant 0 : index
    %c768 = arith.constant 768 : index
    %25 = vector.load %arg3[%c0_14, %c0_15, %c768] : memref<16x8x1024xf32, #tpu.memory_space<vmem>>, vector<16x8x256xf32>
    %26 = vector.extract_strided_slice %2 {offsets = [0, 768], sizes = [16, 256], strides = [1, 1]} : vector<16x1024xf32> to vector<16x256xf32>
    %27 = vector.shape_cast %26 : vector<16x256xf32> to vector<16x1x256xf32>
    %28 = vector.broadcast %27 : vector<16x1x256xf32> to vector<16x8x256xf32>
    %29 = arith.mulf %25, %28 : vector<16x8x256xf32>
    %cst_16 = arith.constant dense<0.000000e+00> : vector<16x8xf32>
    %30 = vector.multi_reduction <add>, %29, %cst_16 [2] : vector<16x8x256xf32> to vector<16x8xf32>
    %31 = arith.addf %24, %30 : vector<16x8xf32>
    %c0_17 = arith.constant 0 : index
    %c0_18 = arith.constant 0 : index
    %32 = vector.load %arg4[%c0_17, %c0_18] : memref<16x8xi32, #tpu.memory_space<vmem>>, vector<16x8xi32>
    %c0_i32 = arith.constant 0 : i32
    %33 = vector.broadcast %c0_i32 : i32 to vector<16x8xi32>
    %34 = arith.cmpi ne, %32, %33 : vector<16x8xi32>
    %cst_19 = arith.constant 0xFF800000 : f32
    %35 = vector.broadcast %cst_19 : f32 to vector<16x8xf32>
    %36 = arith.select %34, %35, %31 : vector<16x8xi1>, vector<16x8xf32>
    %cst_20 = arith.constant dense<0xFF800000> : vector<16xf32>
    %37 = vector.multi_reduction <maximumf>, %36, %cst_20 [1] : vector<16x8xf32> to vector<16xf32>
    %38 = vector.shape_cast %37 : vector<16xf32> to vector<16x1xf32>
    %39 = vector.broadcast %38 : vector<16x1xf32> to vector<16x8xf32>
    %40 = arith.subf %36, %39 : vector<16x8xf32>
    %41 = math.exp %40 : vector<16x8xf32>
    %cst_21 = arith.constant dense<0.000000e+00> : vector<16xf32>
    %42 = vector.multi_reduction <add>, %41, %cst_21 [1] : vector<16x8xf32> to vector<16xf32>
    %43 = vector.shape_cast %42 : vector<16xf32> to vector<16x1xf32>
    %44 = tpu.reciprocal %43 {approx = true} : vector<16x1xf32> -> vector<16x1xf32>
    %45 = vector.broadcast %44 : vector<16x1xf32> to vector<16x8xf32>
    %46 = arith.mulf %41, %45 : vector<16x8xf32>
    %c0_22 = arith.constant 0 : index
    %c0_23 = arith.constant 0 : index
    %47 = vector.load %arg5[%c0_22, %c0_23] : memref<16x8xf32, #tpu.memory_space<vmem>>, vector<16x8xf32>
    tpu.vector_store %arg5[%c0_22, %c0_23], %46 {strides = array<i32>} : memref<16x8xf32, #tpu.memory_space<vmem>>, vector<16x8xf32>,
    return
  }
  func.func @transform_0(%arg0: i32) -> (i32, i32) {
    %c0_i32 = arith.constant 0 : i32
    %c0_i32_0 = arith.constant 0 : i32
    return %arg0, %c0_i32 : i32, i32
  }
  func.func @transform_1(%arg0: i32) -> (i32, i32) {
    %c0_i32 = arith.constant 0 : i32
    %c0_i32_0 = arith.constant 0 : i32
    %c0_i32_1 = arith.constant 0 : i32
    return %c0_i32, %c0_i32_0 : i32, i32
  }
  func.func @transform_2(%arg0: i32) -> (i32, i32, i32) {
    %c0_i32 = arith.constant 0 : i32
    %c0_i32_0 = arith.constant 0 : i32
    %c0_i32_1 = arith.constant 0 : i32
    return %arg0, %c0_i32, %c0_i32_0 : i32, i32, i32
  }
  func.func @transform_3(%arg0: i32) -> (i32, i32) {
    %c0_i32 = arith.constant 0 : i32
    %c0_i32_0 = arith.constant 0 : i32
    return %arg0, %c0_i32 : i32, i32
  }
  func.func @transform_4(%arg0: i32) -> (i32, i32) {
    %c0_i32 = arith.constant 0 : i32
    %c0_i32_0 = arith.constant 0 : i32
    return %arg0, %c0_i32 : i32, i32
  }
}

</mosaic_0001>

<llo_original>
// kernel: tpu_custom_call.1
$region0: #{tpu_custom_call.1}
  #allocation0 [shape = 'u32[]', space=smem, size = 0x4, offset = 0x4, fixed_abs, tag = 'smem constant byte address 0x4 - core index']
  #allocation1 [shape = 'u32[144,128]{1,0:T(1,128)}', space=vmem, size = 0x12000, scoped, tag = 'internal scratch']
  %s0 = inlined_call_operand.hbm [shape: f32[16,300], index: 0, kind: input, shape index: {}]
  %s1 = inlined_call_operand.hbm [shape: f32[300,1024], index: 1, kind: input, shape index: {}]
  %s2 = inlined_call_operand.hbm [shape: f32[16,8,1024], index: 2, kind: input, shape index: {}]
  %s3 = inlined_call_operand.vmem [shape: s32[16,8], index: 3, kind: input, shape index: {}]
  %s4 = inlined_call_operand.vmem [shape: f32[16,8], index: 4, kind: output, shape index: {}]
  %s5 = sld [smem:[#allocation0]]
  $region38: #{tpu_custom_call.1} parent=0
    _
  %s7 = ssub.s32 1, %s5
  %s8 = scalar_select 0, %s7, %s5
  $region1: #{tpu_custom_call.1} parent=0
    #allocation2 [shape = 'u8[24576]{0}', space=vmem, size = 0x6000, scoped, tag = 'input window, operand 0, single buffered']
    #allocation3 [shape = 's32[1]{0}', space=sflag, size = 0x4, scoped, tag = 'scoped memory for tpu_custom_call.1']
    #allocation4 [shape = 'u8[1245184]{0}', space=vmem, size = 0x130000, scoped, tag = 'input window, operand 1, single buffered']
    #allocation5 [shape = 's32[1]{0}', space=sflag, size = 0x4, scoped, tag = 'scoped memory for tpu_custom_call.1']
    #allocation6 [shape = 'u8[524288]{0}', space=vmem, size = 0x80000, scoped, tag = 'input window, operand 2, single buffered']
    %9 = vsyncpa [#allocation3], 0
    %10 = vsyncpa [#allocation5], 0
    // Predicated region
    $region2: #{tpu_custom_call.1} parent=1 // pred_check
      _
    $region3: #{tpu_custom_call.1} parent=1 // pred_check_branch
      %12 = sbr.rel (0) target = $region5
    $region4: #{tpu_custom_call.1} parent=1 // pred_region
      %s14 = ssub.s32 768, 768
      %15 = vsyncadd [#allocation3], %s14
      %s16 = sshll.u32 [#allocation2], 4
      %s17 = int_to_ptr.vmem [resolvable:$true] %s16
      %22 = dma.hbm_to_vmem [thread:$0]  %s0, 768, %s17, [#allocation3], 384, 384, 24
    $region5: #{tpu_custom_call.1} parent=1 // pred_fallthru
      _
    // Predicated region
    $region6: #{tpu_custom_call.1} parent=1 // pred_check
      _
    $region7: #{tpu_custom_call.1} parent=1 // pred_check_branch
      %24 = sbr.rel (0) target = $region9
    $region8: #{tpu_custom_call.1} parent=1 // pred_region
      %s26 = ssub.s32 38912, 38912
      %27 = vsyncadd [#allocation5], %s26
      %s28 = sshll.u32 [#allocation4], 4
      %s29 = int_to_ptr.vmem [resolvable:$true] %s28
      %34 = dma.hbm_to_vmem [thread:$0]  %s1, 38912, %s29, [#allocation5], 1024, 1024, 64
    $region9: #{tpu_custom_call.1} parent=1 // pred_fallthru
      _
    // Predicated region
    $region10: #{tpu_custom_call.1} parent=1 // pred_check
      _
    $region11: #{tpu_custom_call.1} parent=1 // pred_check_branch
      %36 = sbr.rel (0) target = $region13
    $region12: #{tpu_custom_call.1} parent=1 // pred_region
      %s38 = ssub.s32 16384, 16384
      %39 = vsyncadd [#allocation5], %s38
      %s40 = sshll.u32 [#allocation6], 4
      %s41 = int_to_ptr.vmem [resolvable:$true] %s40
      %46 = dma.hbm_to_vmem [thread:$0]  %s2, 16384, %s41, [#allocation5], 1024, 1024, 64
    $region13: #{tpu_custom_call.1} parent=1 // pred_fallthru
      _
    // Predicated region
    $region14: #{tpu_custom_call.1} parent=1 // pred_check
      _
    $region15: #{tpu_custom_call.1} parent=1 // pred_check_branch
      %48 = sbr.rel (0) target = $region17
    $region16: #{tpu_custom_call.1} parent=1 // pred_region
      _
    $region17: #{tpu_custom_call.1} parent=1 // pred_fallthru
      _
    // Predicated region
    $region18: #{tpu_custom_call.1} parent=1 // pred_check
      _
    $region19: #{tpu_custom_call.1} parent=1 // pred_check_branch
      %50 = sbr.rel (0) target = $region21
    $region20: #{tpu_custom_call.1} parent=1 // pred_region
      %51 = dma.done [#allocation3], 768
    $region21: #{tpu_custom_call.1} parent=1 // pred_fallthru
      _
    // Predicated region
    $region22: #{tpu_custom_call.1} parent=1 // pred_check
      _
    $region23: #{tpu_custom_call.1} parent=1 // pred_check_branch
      %53 = sbr.rel (0) target = $region25
    $region24: #{tpu_custom_call.1} parent=1 // pred_region
      %54 = dma.done [#allocation5], 38912
    $region25: #{tpu_custom_call.1} parent=1 // pred_fallthru
      _
    // Predicated region
    $region26: #{tpu_custom_call.1} parent=1 // pred_check
      _
    $region27: #{tpu_custom_call.1} parent=1 // pred_check_branch
      %56 = sbr.rel (0) target = $region29
    $region28: #{tpu_custom_call.1} parent=1 // pred_region
      %57 = dma.done [#allocation5], 16384
    $region29: #{tpu_custom_call.1} parent=1 // pred_fallthru
      _
    %v58 = vld [vmem:[#allocation2] sm:$0xff]
    %v59 = vld [vmem:[#allocation2 + $0x8] sm:$0xff]
    %v60 = vld [vmem:[#allocation2 + $0x10] sm:$0xff]
    %v61 = vld [vmem:[#allocation2 + $0x18] sm:$0xff]
    %v62 = vld [vmem:[#allocation2 + $0x20] sm:$0xff]
    %v63 = vld [vmem:[#allocation2 + $0x28] sm:$0xff]
    %v64 = vld [vmem:[#allocation4] sm:$0xff]
    %v65 = vld [vmem:[#allocation4 + $0x8] sm:$0xff]
    %v66 = vld [vmem:[#allocation4 + $0x10] sm:$0xff]
    %v67 = vld [vmem:[#allocation4 + $0x18] sm:$0xff]
    %v68 = vld [vmem:[#allocation4 + $0x20] sm:$0xff]
    %v69 = vld [vmem:[#allocation4 + $0x28] sm:$0xff]
    %v70 = vld [vmem:[#allocation4 + $0x30] sm:$0xff]
    %v71 = vld [vmem:[#allocation4 + $0x38] sm:$0xff]
    %v72 = vld [vmem:[#allocation4 + $0x40] sm:$0xff]
    %v73 = vld [vmem:[#allocation4 + $0x48] sm:$0xff]
    %v74 = vld [vmem:[#allocation4 + $0x50] sm:$0xff]
    %v75 = vld [vmem:[#allocation4 + $0x58] sm:$0xff]
    %v76 = vld [vmem:[#allocation4 + $0x60] sm:$0xff]
    %v77 = vld [vmem:[#allocation4 + $0x68] sm:$0xff]
    %v78 = vld [vmem:[#allocation4 + $0x70] sm:$0xff]
    %v79 = vld [vmem:[#allocation4 + $0x78] sm:$0xff]
    %v80 = vld [vmem:[#allocation4 + $0x80] sm:$0xff]
    %v81 = vld [vmem:[#allocation4 + $0x88] sm:$0xff]
    %v82 = vld [vmem:[#allocation4 + $0x90] sm:$0xff]
    %v83 = vld [vmem:[#allocation4 + $0x98] sm:$0xff]
    %v84 = vld [vmem:[#allocation4 + $0xa0] sm:$0xff]
    %v85 = vld [vmem:[#allocation4 + $0xa8] sm:$0xff]
    %v86 = vld [vmem:[#allocation4 + $0xb0] sm:$0xff]
    %v87 = vld [vmem:[#allocation4 + $0xb8] sm:$0xff]
    %v88 = vld [vmem:[#allocation4 + $0xc0] sm:$0xff]
    %v89 = vld [vmem:[#allocation4 + $0xc8] sm:$0xff]
    %v90 = vld [vmem:[#allocation4 + $0xd0] sm:$0xff]
    %v91 = vld [vmem:[#allocation4 + $0xd8] sm:$0xff]
    %v92 = vld [vmem:[#allocation4 + $0xe0] sm:$0xff]
    %v93 = vld [vmem:[#allocation4 + $0xe8] sm:$0xff]
    %v94 = vld [vmem:[#allocation4 + $0xf0] sm:$0xff]
    %v95 = vld [vmem:[#allocation4 + $0xf8] sm:$0xff]
    %v96 = vld [vmem:[#allocation4 + $0x100] sm:$0xff]
    %v97 = vld [vmem:[#allocation4 + $0x108] sm:$0xff]
    %v98 = vld [vmem:[#allocation4 + $0x110] sm:$0xff]
    %v99 = vld [vmem:[#allocation4 + $0x118] sm:$0xff]
    %v100 = vld [vmem:[#allocation4 + $0x120] sm:$0xff]
    %v101 = vld [vmem:[#allocation4 + $0x128] sm:$0xff]
    %v102 = vld [vmem:[#allocation4 + $0x130] sm:$0xff]
    %v103 = vld [vmem:[#allocation4 + $0x138] sm:$0xff]
    %v104 = vld [vmem:[#allocation4 + $0x140] sm:$0xff]
    %v105 = vld [vmem:[#allocation4 + $0x148] sm:$0xff]
    %v106 = vld [vmem:[#allocation4 + $0x150] sm:$0xff]
    %v107 = vld [vmem:[#allocation4 + $0x158] sm:$0xff]
    %v108 = vld [vmem:[#allocation4 + $0x160] sm:$0xff]
    %v109 = vld [vmem:[#allocation4 + $0x168] sm:$0xff]
    %v110 = vld [vmem:[#allocation4 + $0x170] sm:$0xff]
    %v111 = vld [vmem:[#allocation4 + $0x178] sm:$0xff]
    %v112 = vld [vmem:[#allocation4 + $0x180] sm:$0xff]
    %v113 = vld [vmem:[#allocation4 + $0x188] sm:$0xff]
    %v114 = vld [vmem:[#allocation4 + $0x190] sm:$0xff]
    %v115 = vld [vmem:[#allocation4 + $0x198] sm:$0xff]
    %v116 = vld [vmem:[#allocation4 + $0x1a0] sm:$0xff]
    %v117 = vld [vmem:[#allocation4 + $0x1a8] sm:$0xff]
    %v118 = vld [vmem:[#allocation4 + $0x1b0] sm:$0xff]
    %v119 = vld [vmem:[#allocation4 + $0x1b8] sm:$0xff]
    %v120 = vld [vmem:[#allocation4 + $0x1c0] sm:$0xff]
    %v121 = vld [vmem:[#allocation4 + $0x1c8] sm:$0xff]
    %v122 = vld [vmem:[#allocation4 + $0x1d0] sm:$0xff]
    %v123 = vld [vmem:[#allocation4 + $0x1d8] sm:$0xff]
    %v124 = vld [vmem:[#allocation4 + $0x1e0] sm:$0xff]
    %v125 = vld [vmem:[#allocation4 + $0x1e8] sm:$0xff]
    %v126 = vld [vmem:[#allocation4 + $0x1f0] sm:$0xff]
    %v127 = vld [vmem:[#allocation4 + $0x1f8] sm:$0xff]
    %v128 = vld [vmem:[#allocation4 + $0x200] sm:$0xff]
    %v129 = vld [vmem:[#allocation4 + $0x208] sm:$0xff]
    %v130 = vld [vmem:[#allocation4 + $0x210] sm:$0xff]
    %v131 = vld [vmem:[#allocation4 + $0x218] sm:$0xff]
    %v132 = vld [vmem:[#allocation4 + $0x220] sm:$0xff]
    %v133 = vld [vmem:[#allocation4 + $0x228] sm:$0xff]
    %v134 = vld [vmem:[#allocation4 + $0x230] sm:$0xff]
    %v135 = vld [vmem:[#allocation4 + $0x238] sm:$0xff]
    %v136 = vld [vmem:[#allocation4 + $0x240] sm:$0xff]
    %v137 = vld [vmem:[#allocation4 + $0x248] sm:$0xff]
    %v138 = vld [vmem:[#allocation4 + $0x250] sm:$0xff]
    %v139 = vld [vmem:[#allocation4 + $0x258] sm:$0xff]
    %v140 = vld [vmem:[#allocation4 + $0x260] sm:$0xff]
    %v141 = vld [vmem:[#allocation4 + $0x268] sm:$0xff]
    %v142 = vld [vmem:[#allocation4 + $0x270] sm:$0xff]
    %v143 = vld [vmem:[#allocation4 + $0x278] sm:$0xff]
    %v144 = vld [vmem:[#allocation4 + $0x280] sm:$0xff]
    %v145 = vld [vmem:[#allocation4 + $0x288] sm:$0xff]
    %v146 = vld [vmem:[#allocation4 + $0x290] sm:$0xff]
    %v147 = vld [vmem:[#allocation4 + $0x298] sm:$0xff]
    %v148 = vld [vmem:[#allocation4 + $0x2a0] sm:$0xff]
    %v149 = vld [vmem:[#allocation4 + $0x2a8] sm:$0xff]
    %v150 = vld [vmem:[#allocation4 + $0x2b0] sm:$0xff]
    %v151 = vld [vmem:[#allocation4 + $0x2b8] sm:$0xff]
    %v152 = vld [vmem:[#allocation4 + $0x2c0] sm:$0xff]
    %v153 = vld [vmem:[#allocation4 + $0x2c8] sm:$0xff]
    %v154 = vld [vmem:[#allocation4 + $0x2d0] sm:$0xff]
    %v155 = vld [vmem:[#allocation4 + $0x2d8] sm:$0xff]
    %v156 = vld [vmem:[#allocation4 + $0x2e0] sm:$0xff]
    %v157 = vld [vmem:[#allocation4 + $0x2e8] sm:$0xff]
    %v158 = vld [vmem:[#allocation4 + $0x2f0] sm:$0xff]
    %v159 = vld [vmem:[#allocation4 + $0x2f8] sm:$0xff]
    %v160 = vld [vmem:[#allocation4 + $0x300] sm:$0xff]
    %v161 = vld [vmem:[#allocation4 + $0x308] sm:$0xff]
    %v162 = vld [vmem:[#allocation4 + $0x310] sm:$0xff]
    %v163 = vld [vmem:[#allocation4 + $0x318] sm:$0xff]
    %v164 = vld [vmem:[#allocation4 + $0x320] sm:$0xff]
    %v165 = vld [vmem:[#allocation4 + $0x328] sm:$0xff]
    %v166 = vld [vmem:[#allocation4 + $0x330] sm:$0xff]
    %v167 = vld [vmem:[#allocation4 + $0x338] sm:$0xff]
    %v168 = vld [vmem:[#allocation4 + $0x340] sm:$0xff]
    %v169 = vld [vmem:[#allocation4 + $0x348] sm:$0xff]
    %v170 = vld [vmem:[#allocation4 + $0x350] sm:$0xff]
    %v171 = vld [vmem:[#allocation4 + $0x358] sm:$0xff]
    %v172 = vld [vmem:[#allocation4 + $0x360] sm:$0xff]
    %v173 = vld [vmem:[#allocation4 + $0x368] sm:$0xff]
    %v174 = vld [vmem:[#allocation4 + $0x370] sm:$0xff]
    %v175 = vld [vmem:[#allocation4 + $0x378] sm:$0xff]
    %v176 = vld [vmem:[#allocation4 + $0x380] sm:$0xff]
    %v177 = vld [vmem:[#allocation4 + $0x388] sm:$0xff]
    %v178 = vld [vmem:[#allocation4 + $0x390] sm:$0xff]
    %v179 = vld [vmem:[#allocation4 + $0x398] sm:$0xff]
    %v180 = vld [vmem:[#allocation4 + $0x3a0] sm:$0xff]
    %v181 = vld [vmem:[#allocation4 + $0x3a8] sm:$0xff]
    %v182 = vld [vmem:[#allocation4 + $0x3b0] sm:$0xff]
    %v183 = vld [vmem:[#allocation4 + $0x3b8] sm:$0xff]
    %v184 = vld [vmem:[#allocation4 + $0x3c0] sm:$0xff]
    %v185 = vld [vmem:[#allocation4 + $0x3c8] sm:$0xff]
    %v186 = vld [vmem:[#allocation4 + $0x3d0] sm:$0xff]
    %v187 = vld [vmem:[#allocation4 + $0x3d8] sm:$0xff]
    %v188 = vld [vmem:[#allocation4 + $0x3e0] sm:$0xff]
    %v189 = vld [vmem:[#allocation4 + $0x3e8] sm:$0xff]
    %v190 = vld [vmem:[#allocation4 + $0x3f0] sm:$0xff]
    %v191 = vld [vmem:[#allocation4 + $0x3f8] sm:$0xff]
    %v192 = vld [vmem:[#allocation4 + $0x400] sm:$0xff]
    %v193 = vld [vmem:[#allocation4 + $0x408] sm:$0xff]
    %v194 = vld [vmem:[#allocation4 + $0x410] sm:$0xff]
    %v195 = vld [vmem:[#allocation4 + $0x418] sm:$0xff]
    %v196 = vld [vmem:[#allocation4 + $0x420] sm:$0xff]
    %v197 = vld [vmem:[#allocation4 + $0x428] sm:$0xff]
    %v198 = vld [vmem:[#allocation4 + $0x430] sm:$0xff]
    %v199 = vld [vmem:[#allocation4 + $0x438] sm:$0xff]
    %v200 = vld [vmem:[#allocation4 + $0x440] sm:$0xff]
    %v201 = vld [vmem:[#allocation4 + $0x448] sm:$0xff]
    %v202 = vld [vmem:[#allocation4 + $0x450] sm:$0xff]
    %v203 = vld [vmem:[#allocation4 + $0x458] sm:$0xff]
    %v204 = vld [vmem:[#allocation4 + $0x460] sm:$0xff]
    %v205 = vld [vmem:[#allocation4 + $0x468] sm:$0xff]
    %v206 = vld [vmem:[#allocation4 + $0x470] sm:$0xff]
    %v207 = vld [vmem:[#allocation4 + $0x478] sm:$0xff]
    %v208 = vld [vmem:[#allocation4 + $0x480] sm:$0xff]
    %v209 = vld [vmem:[#allocation4 + $0x488] sm:$0xff]
    %v210 = vld [vmem:[#allocation4 + $0x490] sm:$0xff]
    %v211 = vld [vmem:[#allocation4 + $0x498] sm:$0xff]
    %v212 = vld [vmem:[#allocation4 + $0x4a0] sm:$0xff]
    %v213 = vld [vmem:[#allocation4 + $0x4a8] sm:$0xff]
    %v214 = vld [vmem:[#allocation4 + $0x4b0] sm:$0xff]
    %v215 = vld [vmem:[#allocation4 + $0x4b8] sm:$0xff]
    %v216 = vld [vmem:[#allocation4 + $0x4c0] sm:$0xff]
    %v217 = vld [vmem:[#allocation4 + $0x4c8] sm:$0xff]
    %v218 = vld [vmem:[#allocation4 + $0x4d0] sm:$0xff]
    %v219 = vld [vmem:[#allocation4 + $0x4d8] sm:$0xff]
    %v220 = vld [vmem:[#allocation4 + $0x4e0] sm:$0xff]
    %v221 = vld [vmem:[#allocation4 + $0x4e8] sm:$0xff]
    %v222 = vld [vmem:[#allocation4 + $0x4f0] sm:$0xff]
    %v223 = vld [vmem:[#allocation4 + $0x4f8] sm:$0xff]
    %v224 = vld [vmem:[#allocation4 + $0x500] sm:$0xff]
    %v225 = vld [vmem:[#allocation4 + $0x508] sm:$0xff]
    %v226 = vld [vmem:[#allocation4 + $0x510] sm:$0xff]
    %v227 = vld [vmem:[#allocation4 + $0x518] sm:$0xff]
    %v228 = vld [vmem:[#allocation4 + $0x520] sm:$0xff]
    %v229 = vld [vmem:[#allocation4 + $0x528] sm:$0xff]
    %v230 = vld [vmem:[#allocation4 + $0x530] sm:$0xff]
    %v231 = vld [vmem:[#allocation4 + $0x538] sm:$0xff]
    %v232 = vld [vmem:[#allocation4 + $0x540] sm:$0xff]
    %v233 = vld [vmem:[#allocation4 + $0x548] sm:$0xff]
    %v234 = vld [vmem:[#allocation4 + $0x550] sm:$0xff]
    %v235 = vld [vmem:[#allocation4 + $0x558] sm:$0xff]
    %v236 = vld [vmem:[#allocation4 + $0x560] sm:$0xff]
    %v237 = vld [vmem:[#allocation4 + $0x568] sm:$0xff]
    %v238 = vld [vmem:[#allocation4 + $0x570] sm:$0xff]
    %v239 = vld [vmem:[#allocation4 + $0x578] sm:$0xff]
    %v240 = vld [vmem:[#allocation4 + $0x580] sm:$0xff]
    %v241 = vld [vmem:[#allocation4 + $0x588] sm:$0xff]
    %v242 = vld [vmem:[#allocation4 + $0x590] sm:$0xff]
    %v243 = vld [vmem:[#allocation4 + $0x598] sm:$0xff]
    %v244 = vld [vmem:[#allocation4 + $0x5a0] sm:$0xff]
    %v245 = vld [vmem:[#allocation4 + $0x5a8] sm:$0xff]
    %v246 = vld [vmem:[#allocation4 + $0x5b0] sm:$0xff]
    %v247 = vld [vmem:[#allocation4 + $0x5b8] sm:$0xff]
    %v248 = vld [vmem:[#allocation4 + $0x5c0] sm:$0xff]
    %v249 = vld [vmem:[#allocation4 + $0x5c8] sm:$0xff]
    %v250 = vld [vmem:[#allocation4 + $0x5d0] sm:$0xff]
    %v251 = vld [vmem:[#allocation4 + $0x5d8] sm:$0xff]
    %v252 = vld [vmem:[#allocation4 + $0x5e0] sm:$0xff]
    %v253 = vld [vmem:[#allocation4 + $0x5e8] sm:$0xff]
    %v254 = vld [vmem:[#allocation4 + $0x5f0] sm:$0xff]
    %v255 = vld [vmem:[#allocation4 + $0x5f8] sm:$0xff]
    %v256 = vld [vmem:[#allocation4 + $0x600] sm:$0xff]
    %v257 = vld [vmem:[#allocation4 + $0x608] sm:$0xff]
    %v258 = vld [vmem:[#allocation4 + $0x610] sm:$0xff]
    %v259 = vld [vmem:[#allocation4 + $0x618] sm:$0xff]
    %v260 = vld [vmem:[#allocation4 + $0x620] sm:$0xff]
    %v261 = vld [vmem:[#allocation4 + $0x628] sm:$0xff]
    %v262 = vld [vmem:[#allocation4 + $0x630] sm:$0xff]
    %v263 = vld [vmem:[#allocation4 + $0x638] sm:$0xff]
    %v264 = vld [vmem:[#allocation4 + $0x640] sm:$0xff]
    %v265 = vld [vmem:[#allocation4 + $0x648] sm:$0xff]
    %v266 = vld [vmem:[#allocation4 + $0x650] sm:$0xff]
    %v267 = vld [vmem:[#allocation4 + $0x658] sm:$0xff]
    %v268 = vld [vmem:[#allocation4 + $0x660] sm:$0xff]
    %v269 = vld [vmem:[#allocation4 + $0x668] sm:$0xff]
    %v270 = vld [vmem:[#allocation4 + $0x670] sm:$0xff]
    %v271 = vld [vmem:[#allocation4 + $0x678] sm:$0xff]
    %v272 = vld [vmem:[#allocation4 + $0x680] sm:$0xff]
    %v273 = vld [vmem:[#allocation4 + $0x688] sm:$0xff]
    %v274 = vld [vmem:[#allocation4 + $0x690] sm:$0xff]
    %v275 = vld [vmem:[#allocation4 + $0x698] sm:$0xff]
    %v276 = vld [vmem:[#allocation4 + $0x6a0] sm:$0xff]
    %v277 = vld [vmem:[#allocation4 + $0x6a8] sm:$0xff]
    %v278 = vld [vmem:[#allocation4 + $0x6b0] sm:$0xff]
    %v279 = vld [vmem:[#allocation4 + $0x6b8] sm:$0xff]
    %v280 = vld [vmem:[#allocation4 + $0x6c0] sm:$0xff]
    %v281 = vld [vmem:[#allocation4 + $0x6c8] sm:$0xff]
    %v282 = vld [vmem:[#allocation4 + $0x6d0] sm:$0xff]
    %v283 = vld [vmem:[#allocation4 + $0x6d8] sm:$0xff]
    %v284 = vld [vmem:[#allocation4 + $0x6e0] sm:$0xff]
    %v285 = vld [vmem:[#allocation4 + $0x6e8] sm:$0xff]
    %v286 = vld [vmem:[#allocation4 + $0x6f0] sm:$0xff]
    %v287 = vld [vmem:[#allocation4 + $0x6f8] sm:$0xff]
    %v288 = vld [vmem:[#allocation4 + $0x700] sm:$0xff]
    %v289 = vld [vmem:[#allocation4 + $0x708] sm:$0xff]
    %v290 = vld [vmem:[#allocation4 + $0x710] sm:$0xff]
    %v291 = vld [vmem:[#allocation4 + $0x718] sm:$0xff]
    %v292 = vld [vmem:[#allocation4 + $0x720] sm:$0xff]
    %v293 = vld [vmem:[#allocation4 + $0x728] sm:$0xff]
    %v294 = vld [vmem:[#allocation4 + $0x730] sm:$0xff]
    %v295 = vld [vmem:[#allocation4 + $0x738] sm:$0xff]
    %v296 = vld [vmem:[#allocation4 + $0x740] sm:$0xff]
    %v297 = vld [vmem:[#allocation4 + $0x748] sm:$0xff]
    %v298 = vld [vmem:[#allocation4 + $0x750] sm:$0xff]
    %v299 = vld [vmem:[#allocation4 + $0x758] sm:$0xff]
    %v300 = vld [vmem:[#allocation4 + $0x760] sm:$0xff]
    %v301 = vld [vmem:[#allocation4 + $0x768] sm:$0xff]
    %v302 = vld [vmem:[#allocation4 + $0x770] sm:$0xff]
    %v303 = vld [vmem:[#allocation4 + $0x778] sm:$0xff]
    %v304 = vld [vmem:[#allocation4 + $0x780] sm:$0xff]
    %v305 = vld [vmem:[#allocation4 + $0x788] sm:$0xff]
    %v306 = vld [vmem:[#allocation4 + $0x790] sm:$0xff]
    %v307 = vld [vmem:[#allocation4 + $0x798] sm:$0xff]
    %v308 = vld [vmem:[#allocation4 + $0x7a0] sm:$0xff]
    %v309 = vld [vmem:[#allocation4 + $0x7a8] sm:$0xff]
    %v310 = vld [vmem:[#allocation4 + $0x7b0] sm:$0xff]
    %v311 = vld [vmem:[#allocation4 + $0x7b8] sm:$0xff]
    %v312 = vld [vmem:[#allocation4 + $0x7c0] sm:$0xff]
    %v313 = vld [vmem:[#allocation4 + $0x7c8] sm:$0xff]
    %v314 = vld [vmem:[#allocation4 + $0x7d0] sm:$0xff]
    %v315 = vld [vmem:[#allocation4 + $0x7d8] sm:$0xff]
    %v316 = vld [vmem:[#allocation4 + $0x7e0] sm:$0xff]
    %v317 = vld [vmem:[#allocation4 + $0x7e8] sm:$0xff]
    %v318 = vld [vmem:[#allocation4 + $0x7f0] sm:$0xff]
    %v319 = vld [vmem:[#allocation4 + $0x7f8] sm:$0xff]
    %v320 = vld [vmem:[#allocation4 + $0x800] sm:$0xff]
    %v321 = vld [vmem:[#allocation4 + $0x808] sm:$0xff]
    %v322 = vld [vmem:[#allocation4 + $0x810] sm:$0xff]
    %v323 = vld [vmem:[#allocation4 + $0x818] sm:$0xff]
    %v324 = vld [vmem:[#allocation4 + $0x820] sm:$0xff]
    %v325 = vld [vmem:[#allocation4 + $0x828] sm:$0xff]
    %v326 = vld [vmem:[#allocation4 + $0x830] sm:$0xff]
    %v327 = vld [vmem:[#allocation4 + $0x838] sm:$0xff]
    %v328 = vld [vmem:[#allocation4 + $0x840] sm:$0xff]
    %v329 = vld [vmem:[#allocation4 + $0x848] sm:$0xff]
    %v330 = vld [vmem:[#allocation4 + $0x850] sm:$0xff]
    %v331 = vld [vmem:[#allocation4 + $0x858] sm:$0xff]
    %v332 = vld [vmem:[#allocation4 + $0x860] sm:$0xff]
    %v333 = vld [vmem:[#allocation4 + $0x868] sm:$0xff]
    %v334 = vld [vmem:[#allocation4 + $0x870] sm:$0xff]
    %v335 = vld [vmem:[#allocation4 + $0x878] sm:$0xff]
    %v336 = vld [vmem:[#allocation4 + $0x880] sm:$0xff]
    %v337 = vld [vmem:[#allocation4 + $0x888] sm:$0xff]
    %v338 = vld [vmem:[#allocation4 + $0x890] sm:$0xff]
    %v339 = vld [vmem:[#allocation4 + $0x898] sm:$0xff]
    %v340 = vld [vmem:[#allocation4 + $0x8a0] sm:$0xff]
    %v341 = vld [vmem:[#allocation4 + $0x8a8] sm:$0xff]
    %v342 = vld [vmem:[#allocation4 + $0x8b0] sm:$0xff]
    %v343 = vld [vmem:[#allocation4 + $0x8b8] sm:$0xff]
    %v344 = vld [vmem:[#allocation4 + $0x8c0] sm:$0xff]
    %v345 = vld [vmem:[#allocation4 + $0x8c8] sm:$0xff]
    %v346 = vld [vmem:[#allocation4 + $0x8d0] sm:$0xff]
    %v347 = vld [vmem:[#allocation4 + $0x8d8] sm:$0xff]
    %v348 = vld [vmem:[#allocation4 + $0x8e0] sm:$0xff]
    %v349 = vld [vmem:[#allocation4 + $0x8e8] sm:$0xff]
    %v350 = vld [vmem:[#allocation4 + $0x8f0] sm:$0xff]
    %v351 = vld [vmem:[#allocation4 + $0x8f8] sm:$0xff]
    %v352 = vld [vmem:[#allocation4 + $0x900] sm:$0xff]
    %v353 = vld [vmem:[#allocation4 + $0x908] sm:$0xff]
    %v354 = vld [vmem:[#allocation4 + $0x910] sm:$0xff]
    %v355 = vld [vmem:[#allocation4 + $0x918] sm:$0xff]
    %v356 = vld [vmem:[#allocation4 + $0x920] sm:$0xff]
    %v357 = vld [vmem:[#allocation4 + $0x928] sm:$0xff]
    %v358 = vld [vmem:[#allocation4 + $0x930] sm:$0xff]
    %v359 = vld [vmem:[#allocation4 + $0x938] sm:$0xff]
    %v360 = vld [vmem:[#allocation4 + $0x940] sm:$0xf]
    %v361 = vld [vmem:[#allocation4 + $0x948] sm:$0xf]
    %v362 = vld [vmem:[#allocation4 + $0x950] sm:$0xf]
    %v363 = vld [vmem:[#allocation4 + $0x958] sm:$0xf]
    %v364 = vld [vmem:[#allocation4 + $0x960] sm:$0xf]
    %v365 = vld [vmem:[#allocation4 + $0x968] sm:$0xf]
    %v366 = vld [vmem:[#allocation4 + $0x970] sm:$0xf]
    %v367 = vld [vmem:[#allocation4 + $0x978] sm:$0xf]
    %vm368 = vcmask 359424
    %v370 = vsel %vm368, %v60, 0
    %v373 = vsel %vm368, %v63, 0
    %vm375 = vcmask 1043456
    %v377 = vsel %vm375, %v360, 0
    %v380 = vsel %vm375, %v361, 0
    %v383 = vsel %vm375, %v362, 0
    %v386 = vsel %vm375, %v363, 0
    %v389 = vsel %vm375, %v364, 0
    %v392 = vsel %vm375, %v365, 0
    %v395 = vsel %vm375, %v366, 0
    %v398 = vsel %vm375, %v367, 0
    %400 = vmatprep.subr.mxu0 %v65
    %401 = vmatpush1.msra.mxu0 %v64
    %402 = vmatprep.subr.mxu0 %v73
    %403 = vmatpush1.msra.mxu0 %v72
    %404 = vmatprep.subr.mxu0 %v81
    %405 = vmatpush1.msra.mxu0 %v80
    %406 = vmatprep.subr.mxu0 %v89
    %407 = vmatpush1.msra.mxu0 %v88
    %408 = vmatprep.subr.mxu0 %v97
    %409 = vmatpush1.msra.mxu0 %v96
    %410 = vmatprep.subr.mxu0 %v105
    %411 = vmatpush1.msra.mxu0 %v104
    %412 = vmatprep.subr.mxu0 %v113
    %413 = vmatpush1.msra.mxu0 %v112
    %414 = vmatprep.subr.mxu0 %v121
    %415 = vmatpush1.msra.mxu0 %v120
    %416 = vmatprep.subr.mxu0 %v129
    %417 = vmatpush1.msra.mxu0 %v128
    %418 = vmatprep.subr.mxu0 %v137
    %419 = vmatpush1.msra.mxu0 %v136
    %420 = vmatprep.subr.mxu0 %v145
    %421 = vmatpush1.msra.mxu0 %v144
    %422 = vmatprep.subr.mxu0 %v153
    %423 = vmatpush1.msra.mxu0 %v152
    %424 = vmatprep.subr.mxu0 %v161
    %425 = vmatpush1.msra.mxu0 %v160
    %426 = vmatprep.subr.mxu0 %v169
    %427 = vmatpush1.msra.mxu0 %v168
    %428 = vmatprep.subr.mxu0 %v177
    %429 = vmatpush1.msra.mxu0 %v176
    %430 = vmatprep.subr.mxu0 %v185
    %431 = vmatpush1.msra.mxu0 %v184
    %432 = vmatprep.subr.mxu0 %v193
    %433 = vmatpush1.msra.mxu0 %v192
    %434 = vmatprep.subr.mxu0 %v201
    %435 = vmatpush1.msra.mxu0 %v200
    %436 = vmatprep.subr.mxu0 %v209
    %437 = vmatpush1.msra.mxu0 %v208
    %438 = vmatprep.subr.mxu0 %v217
    %439 = vmatpush1.msra.mxu0 %v216
    %440 = vmatprep.subr.mxu0 %v225
    %441 = vmatpush1.msra.mxu0 %v224
    %442 = vmatprep.subr.mxu0 %v233
    %443 = vmatpush1.msra.mxu0 %v232
    %444 = vmatprep.subr.mxu0 %v241
    %445 = vmatpush1.msra.mxu0 %v240
    %446 = vmatprep.subr.mxu0 %v249
    %447 = vmatpush1.msra.mxu0 %v248
    %448 = vmatprep.subr.mxu0 %v257
    %449 = vmatpush1.msra.mxu0 %v256
    %450 = vmatprep.subr.mxu0 %v265
    %451 = vmatpush1.msra.mxu0 %v264
    %452 = vmatprep.subr.mxu0 %v273
    %453 = vmatpush1.msra.mxu0 %v272
    %454 = vmatprep.subr.mxu0 %v281
    %455 = vmatpush1.msra.mxu0 %v280
    %456 = vmatprep.subr.mxu0 %v289
    %457 = vmatpush1.msra.mxu0 %v288
    %458 = vmatprep.subr.mxu0 %v297
    %459 = vmatpush1.msra.mxu0 %v296
    %460 = vmatprep.subr.mxu0 %v305
    %461 = vmatpush1.msra.mxu0 %v304
    %462 = vmatprep.subr.mxu0 %v313
    %463 = vmatpush1.msra.mxu0 %v312
    %464 = vmatprep.mubr.f32.mxu0 %v59
    %465 = vmatmul.mubr.f32.gmra.mrb[0].mxu0 %v58
    %v466 = vpop.f32.mrb[0].mxu0
    %v467 = vadd.f32 0.0, %v466
    %v468 = vpop.f32.mrb[0].mxu0
    %v469 = vadd.f32 0.0, %v468
    %470 = vmatprep.mubr.f32.mxu0 %v62
    %471 = vmatmul.mubr.f32.gmra.mrb[0].mxu0 %v61
    %v472 = vpop.f32.mrb[0].mxu0
    %v473 = vadd.f32 0.0, %v472
    %v474 = vpop.f32.mrb[0].mxu0
    %v475 = vadd.f32 0.0, %v474
    %476 = vdwg.mxu0
    %477 = vmatprep.subr.mxu0 %v321
    %478 = vmatpush1.msra.mxu0 %v320
    %479 = vmatprep.subr.mxu0 %v329
    %480 = vmatpush1.msra.mxu0 %v328
    %481 = vmatprep.subr.mxu0 %v337
    %482 = vmatpush1.msra.mxu0 %v336
    %483 = vmatprep.subr.mxu0 %v345
    %484 = vmatpush1.msra.mxu0 %v344
    %485 = vmatprep.subr.mxu0 %v353
    %486 = vmatpush1.msra.mxu0 %v352
    %487 = vmatprep.subr.mxu0 %v380
    %488 = vmatpush1.msra.mxu0 %v377
    %489 = vmatprep.subr.mxu0 0.0
    %490 = vmatpush1.msra.mxu0 0.0
    %491 = vmatprep.subr.mxu0 0.0
    %492 = vmatpush1.msra.mxu0 0.0
    %493 = vmatprep.subr.mxu0 0.0
    %494 = vmatpush1.msra.mxu0 0.0
    %495 = vmatprep.subr.mxu0 0.0
    %496 = vmatpush1.msra.mxu0 0.0
    %497 = vmatprep.subr.mxu0 0.0
    %498 = vmatpush1.msra.mxu0 0.0
    %499 = vmatprep.subr.mxu0 0.0
    %500 = vmatpush1.msra.mxu0 0.0
    %501 = vmatprep.subr.mxu0 0.0
    %502 = vmatpush1.msra.mxu0 0.0
    %503 = vmatprep.subr.mxu0 0.0
    %504 = vmatpush1.msra.mxu0 0.0
    %505 = vmatprep.subr.mxu0 0.0
    %506 = vmatpush1.msra.mxu0 0.0
    %507 = vmatprep.subr.mxu0 0.0
    %508 = vmatpush1.msra.mxu0 0.0
    %509 = vmatprep.subr.mxu0 0.0
    %510 = vmatpush1.msra.mxu0 0.0
    %511 = vmatprep.subr.mxu0 0.0
    %512 = vmatpush1.msra.mxu0 0.0
    %513 = vmatprep.subr.mxu0 0.0
    %514 = vmatpush1.msra.mxu0 0.0
    %515 = vmatprep.subr.mxu0 0.0
    %516 = vmatpush1.msra.mxu0 0.0
    %517 = vmatprep.subr.mxu0 0.0
    %518 = vmatpush1.msra.mxu0 0.0
    %519 = vmatprep.subr.mxu0 0.0
    %520 = vmatpush1.msra.mxu0 0.0
    %521 = vmatprep.subr.mxu0 0.0
    %522 = vmatpush1.msra.mxu0 0.0
    %523 = vmatprep.subr.mxu0 0.0
    %524 = vmatpush1.msra.mxu0 0.0
    %525 = vmatprep.subr.mxu0 0.0
    %526 = vmatpush1.msra.mxu0 0.0
    %527 = vmatprep.subr.mxu0 0.0
    %528 = vmatpush1.msra.mxu0 0.0
    %529 = vmatprep.subr.mxu0 0.0
    %530 = vmatpush1.msra.mxu0 0.0
    %531 = vmatprep.subr.mxu0 0.0
    %532 = vmatpush1.msra.mxu0 0.0
    %533 = vmatprep.subr.mxu0 0.0
    %534 = vmatpush1.msra.mxu0 0.0
    %535 = vmatprep.subr.mxu0 0.0
    %536 = vmatpush1.msra.mxu0 0.0
    %537 = vmatprep.subr.mxu0 0.0
    %538 = vmatpush1.msra.mxu0 0.0
    %539 = vmatprep.subr.mxu0 0.0
    %540 = vmatpush1.msra.mxu0 0.0
    %541 = vmatprep.mubr.f32.mxu0 0.0
    %542 = vmatmul.mubr.f32.gmra.mrb[0].mxu0 %v370
    %v543 = vpop.f32.mrb[0].mxu0
    %v544 = vadd.f32 %v467, %v543
    %v545 = vpop.f32.mrb[0].mxu0
    %v546 = vadd.f32 %v469, %v545
    %547 = vmatprep.mubr.f32.mxu0 0.0
    %548 = vmatmul.mubr.f32.gmra.mrb[0].mxu0 %v373
    %v549 = vpop.f32.mrb[0].mxu0
    %v550 = vadd.f32 %v473, %v549
    %v551 = vpop.f32.mrb[0].mxu0
    %v552 = vadd.f32 %v475, %v551
    %553 = vdwg.mxu0
    %554 = vmatprep.subr.mxu0 %v67
    %555 = vmatpush1.msra.mxu0 %v66
    %556 = vmatprep.subr.mxu0 %v75
    %557 = vmatpush1.msra.mxu0 %v74
    %558 = vmatprep.subr.mxu0 %v83
    %559 = vmatpush1.msra.mxu0 %v82
    %560 = vmatprep.subr.mxu0 %v91
    %561 = vmatpush1.msra.mxu0 %v90
    %562 = vmatprep.subr.mxu0 %v99
    %563 = vmatpush1.msra.mxu0 %v98
    %564 = vmatprep.subr.mxu0 %v107
    %565 = vmatpush1.msra.mxu0 %v106
    %566 = vmatprep.subr.mxu0 %v115
    %567 = vmatpush1.msra.mxu0 %v114
    %568 = vmatprep.subr.mxu0 %v123
    %569 = vmatpush1.msra.mxu0 %v122
    %570 = vmatprep.subr.mxu0 %v131
    %571 = vmatpush1.msra.mxu0 %v130
    %572 = vmatprep.subr.mxu0 %v139
    %573 = vmatpush1.msra.mxu0 %v138
    %574 = vmatprep.subr.mxu0 %v147
    %575 = vmatpush1.msra.mxu0 %v146
    %576 = vmatprep.subr.mxu0 %v155
    %577 = vmatpush1.msra.mxu0 %v154
    %578 = vmatprep.subr.mxu0 %v163
    %579 = vmatpush1.msra.mxu0 %v162
    %580 = vmatprep.subr.mxu0 %v171
    %581 = vmatpush1.msra.mxu0 %v170
    %582 = vmatprep.subr.mxu0 %v179
    %583 = vmatpush1.msra.mxu0 %v178
    %584 = vmatprep.subr.mxu0 %v187
    %585 = vmatpush1.msra.mxu0 %v186
    %586 = vmatprep.subr.mxu0 %v195
    %587 = vmatpush1.msra.mxu0 %v194
    %588 = vmatprep.subr.mxu0 %v203
    %589 = vmatpush1.msra.mxu0 %v202
    %590 = vmatprep.subr.mxu0 %v211
    %591 = vmatpush1.msra.mxu0 %v210
    %592 = vmatprep.subr.mxu0 %v219
    %593 = vmatpush1.msra.mxu0 %v218
    %594 = vmatprep.subr.mxu0 %v227
    %595 = vmatpush1.msra.mxu0 %v226
    %596 = vmatprep.subr.mxu0 %v235
    %597 = vmatpush1.msra.mxu0 %v234
    %598 = vmatprep.subr.mxu0 %v243
    %599 = vmatpush1.msra.mxu0 %v242
    %600 = vmatprep.subr.mxu0 %v251
    %601 = vmatpush1.msra.mxu0 %v250
    %602 = vmatprep.subr.mxu0 %v259
    %603 = vmatpush1.msra.mxu0 %v258
    %604 = vmatprep.subr.mxu0 %v267
    %605 = vmatpush1.msra.mxu0 %v266
    %606 = vmatprep.subr.mxu0 %v275
    %607 = vmatpush1.msra.mxu0 %v274
    %608 = vmatprep.subr.mxu0 %v283
    %609 = vmatpush1.msra.mxu0 %v282
    %610 = vmatprep.subr.mxu0 %v291
    %611 = vmatpush1.msra.mxu0 %v290
    %612 = vmatprep.subr.mxu0 %v299
    %613 = vmatpush1.msra.mxu0 %v298
    %614 = vmatprep.subr.mxu0 %v307
    %615 = vmatpush1.msra.mxu0 %v306
    %616 = vmatprep.subr.mxu0 %v315
    %617 = vmatpush1.msra.mxu0 %v314
    %618 = vmatprep.mubr.f32.mxu0 %v59
    %619 = vmatmul.mubr.f32.gmra.mrb[0].mxu0 %v58
    %v620 = vpop.f32.mrb[0].mxu0
    %v621 = vadd.f32 0.0, %v620
    %v622 = vpop.f32.mrb[0].mxu0
    %v623 = vadd.f32 0.0, %v622
    %624 = vmatprep.mubr.f32.mxu0 %v62
    %625 = vmatmul.mubr.f32.gmra.mrb[0].mxu0 %v61
    %v626 = vpop.f32.mrb[0].mxu0
    %v627 = vadd.f32 0.0, %v626
    %v628 = vpop.f32.mrb[0].mxu0
    %v629 = vadd.f32 0.0, %v628
    %630 = vdwg.mxu0
    %631 = vmatprep.subr.mxu0 %v323
    %632 = vmatpush1.msra.mxu0 %v322
    %633 = vmatprep.subr.mxu0 %v331
    %634 = vmatpush1.msra.mxu0 %v330
    %635 = vmatprep.subr.mxu0 %v339
    %636 = vmatpush1.msra.mxu0 %v338
    %637 = vmatprep.subr.mxu0 %v347
    %638 = vmatpush1.msra.mxu0 %v346
    %639 = vmatprep.subr.mxu0 %v355
    %640 = vmatpush1.msra.mxu0 %v354
    %641 = vmatprep.subr.mxu0 %v386
    %642 = vmatpush1.msra.mxu0 %v383
    %643 = vmatprep.subr.mxu0 0.0
    %644 = vmatpush1.msra.mxu0 0.0
    %645 = vmatprep.subr.mxu0 0.0
    %646 = vmatpush1.msra.mxu0 0.0
    %647 = vmatprep.subr.mxu0 0.0
    %648 = vmatpush1.msra.mxu0 0.0
    %649 = vmatprep.subr.mxu0 0.0
    %650 = vmatpush1.msra.mxu0 0.0
    %651 = vmatprep.subr.mxu0 0.0
    %652 = vmatpush1.msra.mxu0 0.0
    %653 = vmatprep.subr.mxu0 0.0
    %654 = vmatpush1.msra.mxu0 0.0
    %655 = vmatprep.subr.mxu0 0.0
    %656 = vmatpush1.msra.mxu0 0.0
    %657 = vmatprep.subr.mxu0 0.0
    %658 = vmatpush1.msra.mxu0 0.0
    %659 = vmatprep.subr.mxu0 0.0
    %660 = vmatpush1.msra.mxu0 0.0
    %661 = vmatprep.subr.mxu0 0.0
    %662 = vmatpush1.msra.mxu0 0.0
    %663 = vmatprep.subr.mxu0 0.0
    %664 = vmatpush1.msra.mxu0 0.0
    %665 = vmatprep.subr.mxu0 0.0
    %666 = vmatpush1.msra.mxu0 0.0
    %667 = vmatprep.subr.mxu0 0.0
    %668 = vmatpush1.msra.mxu0 0.0
    %669 = vmatprep.subr.mxu0 0.0
    %670 = vmatpush1.msra.mxu0 0.0
    %671 = vmatprep.subr.mxu0 0.0
    %672 = vmatpush1.msra.mxu0 0.0
    %673 = vmatprep.subr.mxu0 0.0
    %674 = vmatpush1.msra.mxu0 0.0
    %675 = vmatprep.subr.mxu0 0.0
    %676 = vmatpush1.msra.mxu0 0.0
    %677 = vmatprep.subr.mxu0 0.0
    %678 = vmatpush1.msra.mxu0 0.0
    %679 = vmatprep.subr.mxu0 0.0
    %680 = vmatpush1.msra.mxu0 0.0
    %681 = vmatprep.subr.mxu0 0.0
    %682 = vmatpush1.msra.mxu0 0.0
    %683 = vmatprep.subr.mxu0 0.0
    %684 = vmatpush1.msra.mxu0 0.0
    %685 = vmatprep.subr.mxu0 0.0
    %686 = vmatpush1.msra.mxu0 0.0
    %687 = vmatprep.subr.mxu0 0.0
    %688 = vmatpush1.msra.mxu0 0.0
    %689 = vmatprep.subr.mxu0 0.0
    %690 = vmatpush1.msra.mxu0 0.0
    %691 = vmatprep.subr.mxu0 0.0
    %692 = vmatpush1.msra.mxu0 0.0
    %693 = vmatprep.subr.mxu0 0.0
    %694 = vmatpush1.msra.mxu0 0.0
    %695 = vmatprep.mubr.f32.mxu0 0.0
    %696 = vmatmul.mubr.f32.gmra.mrb[0].mxu0 %v370
    %v697 = vpop.f32.mrb[0].mxu0
    %v698 = vadd.f32 %v621, %v697
    %v699 = vpop.f32.mrb[0].mxu0
    %v700 = vadd.f32 %v623, %v699
    %701 = vmatprep.mubr.f32.mxu0 0.0
    %702 = vmatmul.mubr.f32.gmra.mrb[0].mxu0 %v373
    %v703 = vpop.f32.mrb[0].mxu0
    %v704 = vadd.f32 %v627, %v703
    %v705 = vpop.f32.mrb[0].mxu0
    %v706 = vadd.f32 %v629, %v705
    %707 = vdwg.mxu0
    %708 = vmatprep.subr.mxu0 %v69
    %709 = vmatpush1.msra.mxu0 %v68
    %710 = vmatprep.subr.mxu0 %v77
    %711 = vmatpush1.msra.mxu0 %v76
    %712 = vmatprep.subr.mxu0 %v85
    %713 = vmatpush1.msra.mxu0 %v84
    %714 = vmatprep.subr.mxu0 %v93
    %715 = vmatpush1.msra.mxu0 %v92
    %716 = vmatprep.subr.mxu0 %v101
    %717 = vmatpush1.msra.mxu0 %v100
    %718 = vmatprep.subr.mxu0 %v109
    %719 = vmatpush1.msra.mxu0 %v108
    %720 = vmatprep.subr.mxu0 %v117
    %721 = vmatpush1.msra.mxu0 %v116
    %722 = vmatprep.subr.mxu0 %v125
    %723 = vmatpush1.msra.mxu0 %v124
    %724 = vmatprep.subr.mxu0 %v133
    %725 = vmatpush1.msra.mxu0 %v132
    %726 = vmatprep.subr.mxu0 %v141
    %727 = vmatpush1.msra.mxu0 %v140
    %728 = vmatprep.subr.mxu0 %v149
    %729 = vmatpush1.msra.mxu0 %v148
    %730 = vmatprep.subr.mxu0 %v157
    %731 = vmatpush1.msra.mxu0 %v156
    %732 = vmatprep.subr.mxu0 %v165
    %733 = vmatpush1.msra.mxu0 %v164
    %734 = vmatprep.subr.mxu0 %v173
    %735 = vmatpush1.msra.mxu0 %v172
    %736 = vmatprep.subr.mxu0 %v181
    %737 = vmatpush1.msra.mxu0 %v180
    %738 = vmatprep.subr.mxu0 %v189
    %739 = vmatpush1.msra.mxu0 %v188
    %740 = vmatprep.subr.mxu0 %v197
    %741 = vmatpush1.msra.mxu0 %v196
    %742 = vmatprep.subr.mxu0 %v205
    %743 = vmatpush1.msra.mxu0 %v204
    %744 = vmatprep.subr.mxu0 %v213
    %745 = vmatpush1.msra.mxu0 %v212
    %746 = vmatprep.subr.mxu0 %v221
    %747 = vmatpush1.msra.mxu0 %v220
    %748 = vmatprep.subr.mxu0 %v229
    %749 = vmatpush1.msra.mxu0 %v228
    %750 = vmatprep.subr.mxu0 %v237
    %751 = vmatpush1.msra.mxu0 %v236
    %752 = vmatprep.subr.mxu0 %v245
    %753 = vmatpush1.msra.mxu0 %v244
    %754 = vmatprep.subr.mxu0 %v253
    %755 = vmatpush1.msra.mxu0 %v252
    %756 = vmatprep.subr.mxu0 %v261
    %757 = vmatpush1.msra.mxu0 %v260
    %758 = vmatprep.subr.mxu0 %v269
    %759 = vmatpush1.msra.mxu0 %v268
    %760 = vmatprep.subr.mxu0 %v277
    %761 = vmatpush1.msra.mxu0 %v276
    %762 = vmatprep.subr.mxu0 %v285
    %763 = vmatpush1.msra.mxu0 %v284
    %764 = vmatprep.subr.mxu0 %v293
    %765 = vmatpush1.msra.mxu0 %v292
    %766 = vmatprep.subr.mxu0 %v301
    %767 = vmatpush1.msra.mxu0 %v300
    %768 = vmatprep.subr.mxu0 %v309
    %769 = vmatpush1.msra.mxu0 %v308
    %770 = vmatprep.subr.mxu0 %v317
    %771 = vmatpush1.msra.mxu0 %v316
    %772 = vmatprep.mubr.f32.mxu0 %v59
    %773 = vmatmul.mubr.f32.gmra.mrb[0].mxu0 %v58
    %v774 = vpop.f32.mrb[0].mxu0
    %v775 = vadd.f32 0.0, %v774
    %v776 = vpop.f32.mrb[0].mxu0
    %v777 = vadd.f32 0.0, %v776
    %778 = vmatprep.mubr.f32.mxu0 %v62
    %779 = vmatmul.mubr.f32.gmra.mrb[0].mxu0 %v61
    %v780 = vpop.f32.mrb[0].mxu0
    %v781 = vadd.f32 0.0, %v780
    %v782 = vpop.f32.mrb[0].mxu0
    %v783 = vadd.f32 0.0, %v782
    %784 = vdwg.mxu0
    %785 = vmatprep.subr.mxu0 %v325
    %786 = vmatpush1.msra.mxu0 %v324
    %787 = vmatprep.subr.mxu0 %v333
    %788 = vmatpush1.msra.mxu0 %v332
    %789 = vmatprep.subr.mxu0 %v341
    %790 = vmatpush1.msra.mxu0 %v340
    %791 = vmatprep.subr.mxu0 %v349
    %792 = vmatpush1.msra.mxu0 %v348
    %793 = vmatprep.subr.mxu0 %v357
    %794 = vmatpush1.msra.mxu0 %v356
    %795 = vmatprep.subr.mxu0 %v392
    %796 = vmatpush1.msra.mxu0 %v389
    %797 = vmatprep.subr.mxu0 0.0
    %798 = vmatpush1.msra.mxu0 0.0
    %799 = vmatprep.subr.mxu0 0.0
    %800 = vmatpush1.msra.mxu0 0.0
    %801 = vmatprep.subr.mxu0 0.0
    %802 = vmatpush1.msra.mxu0 0.0
    %803 = vmatprep.subr.mxu0 0.0
    %804 = vmatpush1.msra.mxu0 0.0
    %805 = vmatprep.subr.mxu0 0.0
    %806 = vmatpush1.msra.mxu0 0.0
    %807 = vmatprep.subr.mxu0 0.0
    %808 = vmatpush1.msra.mxu0 0.0
    %809 = vmatprep.subr.mxu0 0.0
    %810 = vmatpush1.msra.mxu0 0.0
    %811 = vmatprep.subr.mxu0 0.0
    %812 = vmatpush1.msra.mxu0 0.0
    %813 = vmatprep.subr.mxu0 0.0
    %814 = vmatpush1.msra.mxu0 0.0
    %815 = vmatprep.subr.mxu0 0.0
    %816 = vmatpush1.msra.mxu0 0.0
    %817 = vmatprep.subr.mxu0 0.0
    %818 = vmatpush1.msra.mxu0 0.0
    %819 = vmatprep.subr.mxu0 0.0
    %820 = vmatpush1.msra.mxu0 0.0
    %821 = vmatprep.subr.mxu0 0.0
    %822 = vmatpush1.msra.mxu0 0.0
    %823 = vmatprep.subr.mxu0 0.0
    %824 = vmatpush1.msra.mxu0 0.0
    %825 = vmatprep.subr.mxu0 0.0
    %826 = vmatpush1.msra.mxu0 0.0
    %827 = vmatprep.subr.mxu0 0.0
    %828 = vmatpush1.msra.mxu0 0.0
    %829 = vmatprep.subr.mxu0 0.0
    %830 = vmatpush1.msra.mxu0 0.0
    %831 = vmatprep.subr.mxu0 0.0
    %832 = vmatpush1.msra.mxu0 0.0
    %833 = vmatprep.subr.mxu0 0.0
    %834 = vmatpush1.msra.mxu0 0.0
    %835 = vmatprep.subr.mxu0 0.0
    %836 = vmatpush1.msra.mxu0 0.0
    %837 = vmatprep.subr.mxu0 0.0
    %838 = vmatpush1.msra.mxu0 0.0
    %839 = vmatprep.subr.mxu0 0.0
    %840 = vmatpush1.msra.mxu0 0.0
    %841 = vmatprep.subr.mxu0 0.0
    %842 = vmatpush1.msra.mxu0 0.0
    %843 = vmatprep.subr.mxu0 0.0
    %844 = vmatpush1.msra.mxu0 0.0
    %845 = vmatprep.subr.mxu0 0.0
    %846 = vmatpush1.msra.mxu0 0.0
    %847 = vmatprep.subr.mxu0 0.0
    %848 = vmatpush1.msra.mxu0 0.0
    %849 = vmatprep.mubr.f32.mxu0 0.0
    %850 = vmatmul.mubr.f32.gmra.mrb[0].mxu0 %v370
    %v851 = vpop.f32.mrb[0].mxu0
    %v852 = vadd.f32 %v775, %v851
    %v853 = vpop.f32.mrb[0].mxu0
    %v854 = vadd.f32 %v777, %v853
    %855 = vmatprep.mubr.f32.mxu0 0.0
    %856 = vmatmul.mubr.f32.gmra.mrb[0].mxu0 %v373
    %v857 = vpop.f32.mrb[0].mxu0
    %v858 = vadd.f32 %v781, %v857
    %v859 = vpop.f32.mrb[0].mxu0
    %v860 = vadd.f32 %v783, %v859
    %861 = vdwg.mxu0
    %862 = vmatprep.subr.mxu0 %v71
    %863 = vmatpush1.msra.mxu0 %v70
    %864 = vmatprep.subr.mxu0 %v79
    %865 = vmatpush1.msra.mxu0 %v78
    %866 = vmatprep.subr.mxu0 %v87
    %867 = vmatpush1.msra.mxu0 %v86
    %868 = vmatprep.subr.mxu0 %v95
    %869 = vmatpush1.msra.mxu0 %v94
    %870 = vmatprep.subr.mxu0 %v103
    %871 = vmatpush1.msra.mxu0 %v102
    %872 = vmatprep.subr.mxu0 %v111
    %873 = vmatpush1.msra.mxu0 %v110
    %874 = vmatprep.subr.mxu0 %v119
    %875 = vmatpush1.msra.mxu0 %v118
    %876 = vmatprep.subr.mxu0 %v127
    %877 = vmatpush1.msra.mxu0 %v126
    %878 = vmatprep.subr.mxu0 %v135
    %879 = vmatpush1.msra.mxu0 %v134
    %880 = vmatprep.subr.mxu0 %v143
    %881 = vmatpush1.msra.mxu0 %v142
    %882 = vmatprep.subr.mxu0 %v151
    %883 = vmatpush1.msra.mxu0 %v150
    %884 = vmatprep.subr.mxu0 %v159
    %885 = vmatpush1.msra.mxu0 %v158
    %886 = vmatprep.subr.mxu0 %v167
    %887 = vmatpush1.msra.mxu0 %v166
    %888 = vmatprep.subr.mxu0 %v175
    %889 = vmatpush1.msra.mxu0 %v174
    %890 = vmatprep.subr.mxu0 %v183
    %891 = vmatpush1.msra.mxu0 %v182
    %892 = vmatprep.subr.mxu0 %v191
    %893 = vmatpush1.msra.mxu0 %v190
    %894 = vmatprep.subr.mxu0 %v199
    %895 = vmatpush1.msra.mxu0 %v198
    %896 = vmatprep.subr.mxu0 %v207
    %897 = vmatpush1.msra.mxu0 %v206
    %898 = vmatprep.subr.mxu0 %v215
    %899 = vmatpush1.msra.mxu0 %v214
    %900 = vmatprep.subr.mxu0 %v223
    %901 = vmatpush1.msra.mxu0 %v222
    %902 = vmatprep.subr.mxu0 %v231
    %903 = vmatpush1.msra.mxu0 %v230
    %904 = vmatprep.subr.mxu0 %v239
    %905 = vmatpush1.msra.mxu0 %v238
    %906 = vmatprep.subr.mxu0 %v247
    %907 = vmatpush1.msra.mxu0 %v246
    %908 = vmatprep.subr.mxu0 %v255
    %909 = vmatpush1.msra.mxu0 %v254
    %910 = vmatprep.subr.mxu0 %v263
    %911 = vmatpush1.msra.mxu0 %v262
    %912 = vmatprep.subr.mxu0 %v271
    %913 = vmatpush1.msra.mxu0 %v270
    %914 = vmatprep.subr.mxu0 %v279
    %915 = vmatpush1.msra.mxu0 %v278
    %916 = vmatprep.subr.mxu0 %v287
    %917 = vmatpush1.msra.mxu0 %v286
    %918 = vmatprep.subr.mxu0 %v295
    %919 = vmatpush1.msra.mxu0 %v294
    %920 = vmatprep.subr.mxu0 %v303
    %921 = vmatpush1.msra.mxu0 %v302
    %922 = vmatprep.subr.mxu0 %v311
    %923 = vmatpush1.msra.mxu0 %v310
    %924 = vmatprep.subr.mxu0 %v319
    %925 = vmatpush1.msra.mxu0 %v318
    %926 = vmatprep.mubr.f32.mxu0 %v59
    %927 = vmatmul.mubr.f32.gmra.mrb[0].mxu0 %v58
    %v928 = vpop.f32.mrb[0].mxu0
    %v929 = vadd.f32 0.0, %v928
    %v930 = vpop.f32.mrb[0].mxu0
    %v931 = vadd.f32 0.0, %v930
    %932 = vmatprep.mubr.f32.mxu0 %v62
    %933 = vmatmul.mubr.f32.gmra.mrb[0].mxu0 %v61
    %v934 = vpop.f32.mrb[0].mxu0
    %v935 = vadd.f32 0.0, %v934
    %v936 = vpop.f32.mrb[0].mxu0
    %v937 = vadd.f32 0.0, %v936
    %938 = vdwg.mxu0
    %939 = vmatprep.subr.mxu0 %v327
    %940 = vmatpush1.msra.mxu0 %v326
    %941 = vmatprep.subr.mxu0 %v335
    %942 = vmatpush1.msra.mxu0 %v334
    %943 = vmatprep.subr.mxu0 %v343
    %944 = vmatpush1.msra.mxu0 %v342
    %945 = vmatprep.subr.mxu0 %v351
    %946 = vmatpush1.msra.mxu0 %v350
    %947 = vmatprep.subr.mxu0 %v359
    %948 = vmatpush1.msra.mxu0 %v358
    %949 = vmatprep.subr.mxu0 %v398
    %950 = vmatpush1.msra.mxu0 %v395
    %951 = vmatprep.subr.mxu0 0.0
    %952 = vmatpush1.msra.mxu0 0.0
    %953 = vmatprep.subr.mxu0 0.0
    %954 = vmatpush1.msra.mxu0 0.0
    %955 = vmatprep.subr.mxu0 0.0
    %956 = vmatpush1.msra.mxu0 0.0
    %957 = vmatprep.subr.mxu0 0.0
    %958 = vmatpush1.msra.mxu0 0.0
    %959 = vmatprep.subr.mxu0 0.0
    %960 = vmatpush1.msra.mxu0 0.0
    %961 = vmatprep.subr.mxu0 0.0
    %962 = vmatpush1.msra.mxu0 0.0
    %963 = vmatprep.subr.mxu0 0.0
    %964 = vmatpush1.msra.mxu0 0.0
    %965 = vmatprep.subr.mxu0 0.0
    %966 = vmatpush1.msra.mxu0 0.0
    %967 = vmatprep.subr.mxu0 0.0
    %968 = vmatpush1.msra.mxu0 0.0
    %969 = vmatprep.subr.mxu0 0.0
    %970 = vmatpush1.msra.mxu0 0.0
    %971 = vmatprep.subr.mxu0 0.0
    %972 = vmatpush1.msra.mxu0 0.0
    %973 = vmatprep.subr.mxu0 0.0
    %974 = vmatpush1.msra.mxu0 0.0
    %975 = vmatprep.subr.mxu0 0.0
    %976 = vmatpush1.msra.mxu0 0.0
    %977 = vmatprep.subr.mxu0 0.0
    %978 = vmatpush1.msra.mxu0 0.0
    %979 = vmatprep.subr.mxu0 0.0
    %980 = vmatpush1.msra.mxu0 0.0
    %981 = vmatprep.subr.mxu0 0.0
    %982 = vmatpush1.msra.mxu0 0.0
    %983 = vmatprep.subr.mxu0 0.0
    %984 = vmatpush1.msra.mxu0 0.0
    %985 = vmatprep.subr.mxu0 0.0
    %986 = vmatpush1.msra.mxu0 0.0
    %987 = vmatprep.subr.mxu0 0.0
    %988 = vmatpush1.msra.mxu0 0.0
    %989 = vmatprep.subr.mxu0 0.0
    %990 = vmatpush1.msra.mxu0 0.0
    %991 = vmatprep.subr.mxu0 0.0
    %992 = vmatpush1.msra.mxu0 0.0
    %993 = vmatprep.subr.mxu0 0.0
    %994 = vmatpush1.msra.mxu0 0.0
    %995 = vmatprep.subr.mxu0 0.0
    %996 = vmatpush1.msra.mxu0 0.0
    %997 = vmatprep.subr.mxu0 0.0
    %998 = vmatpush1.msra.mxu0 0.0
    %999 = vmatprep.subr.mxu0 0.0
    %1000 = vmatpush1.msra.mxu0 0.0
    %1001 = vmatprep.subr.mxu0 0.0
    %1002 = vmatpush1.msra.mxu0 0.0
    %1003 = vmatprep.mubr.f32.mxu0 0.0
    %1004 = vmatmul.mubr.f32.gmra.mrb[0].mxu0 %v370
    %v1005 = vpop.f32.mrb[0].mxu0
    %v1006 = vadd.f32 %v929, %v1005
    %v1007 = vpop.f32.mrb[0].mxu0
    %v1008 = vadd.f32 %v931, %v1007
    %1009 = vmatprep.mubr.f32.mxu0 0.0
    %1010 = vmatmul.mubr.f32.gmra.mrb[0].mxu0 %v373
    %v1011 = vpop.f32.mrb[0].mxu0
    %v1012 = vadd.f32 %v935, %v1011
    %v1013 = vpop.f32.mrb[0].mxu0
    %v1014 = vadd.f32 %v937, %v1013
    %1015 = vdwg.mxu0
    %v1016 = vld [vmem:[#allocation6] sm:$0xff]
    %v1017 = vld [vmem:[#allocation6 + $0x8] sm:$0xff]
    %v1018 = vld [vmem:[#allocation6 + $0x40] sm:$0xff]
    %v1019 = vld [vmem:[#allocation6 + $0x48] sm:$0xff]
    %v1020 = vld [vmem:[#allocation6 + $0x80] sm:$0xff]
    %v1021 = vld [vmem:[#allocation6 + $0x88] sm:$0xff]
    %v1022 = vld [vmem:[#allocation6 + $0xc0] sm:$0xff]
    %v1023 = vld [vmem:[#allocation6 + $0xc8] sm:$0xff]
    %v1024 = vld [vmem:[#allocation6 + $0x100] sm:$0xff]
    %v1025 = vld [vmem:[#allocation6 + $0x108] sm:$0xff]
    %v1026 = vld [vmem:[#allocation6 + $0x140] sm:$0xff]
    %v1027 = vld [vmem:[#allocation6 + $0x148] sm:$0xff]
    %v1028 = vld [vmem:[#allocation6 + $0x180] sm:$0xff]
    %v1029 = vld [vmem:[#allocation6 + $0x188] sm:$0xff]
    %v1030 = vld [vmem:[#allocation6 + $0x1c0] sm:$0xff]
    %v1031 = vld [vmem:[#allocation6 + $0x1c8] sm:$0xff]
    %v1032 = vld [vmem:[#allocation6 + $0x200] sm:$0xff]
    %v1033 = vld [vmem:[#allocation6 + $0x208] sm:$0xff]
    %v1034 = vld [vmem:[#allocation6 + $0x240] sm:$0xff]
    %v1035 = vld [vmem:[#allocation6 + $0x248] sm:$0xff]
    %v1036 = vld [vmem:[#allocation6 + $0x280] sm:$0xff]
    %v1037 = vld [vmem:[#allocation6 + $0x288] sm:$0xff]
    %v1038 = vld [vmem:[#allocation6 + $0x2c0] sm:$0xff]
    %v1039 = vld [vmem:[#allocation6 + $0x2c8] sm:$0xff]
    %v1040 = vld [vmem:[#allocation6 + $0x300] sm:$0xff]
    %v1041 = vld [vmem:[#allocation6 + $0x308] sm:$0xff]
    %v1042 = vld [vmem:[#allocation6 + $0x340] sm:$0xff]
    %v1043 = vld [vmem:[#allocation6 + $0x348] sm:$0xff]
    %v1044 = vld [vmem:[#allocation6 + $0x380] sm:$0xff]
    %v1045 = vld [vmem:[#allocation6 + $0x388] sm:$0xff]
    %v1046 = vld [vmem:[#allocation6 + $0x3c0] sm:$0xff]
    %v1047 = vld [vmem:[#allocation6 + $0x3c8] sm:$0xff]
    %v1052 = vcombine.low %v544, %v546
    %v1053 = vcombine.high %v544, %v546
    %v1055 = vunpack.c.l.s4 1966171168
    %v1056 = vunpack.c.0.s8 %v1055
    %v1057 = vlaneseq
    %v1058 = vshrl.u32 %v1057, 7
    %v1059 = vsub.s32 %v1056, %v1058
    %v1060 = vrot.slane %v1052, %v1059
    %v1062 = vunpack.c.l.s4 1966171168
    %v1063 = vunpack.c.0.s8 %v1062
    %v1064 = vlaneseq
    %v1065 = vshrl.u32 %v1064, 7
    %v1066 = vsub.s32 %v1063, %v1065
    %v1067 = vrot.slane %v1053, %v1066
    %v1068 = vcombine.high %v1060, %v1060
    %v1069 = vcombine.high %v1067, %v1067
    %v1071 = vunpack.c.l.s4 1966171168
    %v1072 = vunpack.c.0.s8 %v1071
    %v1073 = vlaneseq
    %v1074 = vshrl.u32 %v1073, 7
    %v1075 = vsub.s32 %v1072, %v1074
    %v1076 = vrot.slane %v1060, %v1075
    %v1078 = vunpack.c.l.s4 1966171168
    %v1079 = vunpack.c.0.s8 %v1078
    %v1080 = vlaneseq
    %v1081 = vshrl.u32 %v1080, 7
    %v1082 = vsub.s32 %v1079, %v1081
    %v1083 = vrot.slane %v1067, %v1082
    %v1085 = vunpack.c.l.s4 1966171168
    %v1086 = vunpack.c.0.s8 %v1085
    %v1087 = vlaneseq
    %v1088 = vshrl.u32 %v1087, 7
    %v1089 = vsub.s32 %v1086, %v1088
    %v1090 = vrot.slane %v1068, %v1089
    %v1092 = vunpack.c.l.s4 1966171168
    %v1093 = vunpack.c.0.s8 %v1092
    %v1094 = vlaneseq
    %v1095 = vshrl.u32 %v1094, 7
    %v1096 = vsub.s32 %v1093, %v1095
    %v1097 = vrot.slane %v1069, %v1096
    %v1098 = vcombine.high %v1076, %v1076
    %v1099 = vcombine.high %v1083, %v1083
    %v1100 = vcombine.high %v1090, %v1090
    %v1101 = vcombine.high %v1097, %v1097
    %v1102 = vcombine.low %v550, %v552
    %v1103 = vcombine.high %v550, %v552
    %v1105 = vunpack.c.l.s4 1966171168
    %v1106 = vunpack.c.0.s8 %v1105
    %v1107 = vlaneseq
    %v1108 = vshrl.u32 %v1107, 7
    %v1109 = vsub.s32 %v1106, %v1108
    %v1110 = vrot.slane %v1102, %v1109
    %v1112 = vunpack.c.l.s4 1966171168
    %v1113 = vunpack.c.0.s8 %v1112
    %v1114 = vlaneseq
    %v1115 = vshrl.u32 %v1114, 7
    %v1116 = vsub.s32 %v1113, %v1115
    %v1117 = vrot.slane %v1103, %v1116
    %v1118 = vcombine.high %v1110, %v1110
    %v1119 = vcombine.high %v1117, %v1117
    %v1121 = vunpack.c.l.s4 1966171168
    %v1122 = vunpack.c.0.s8 %v1121
    %v1123 = vlaneseq
    %v1124 = vshrl.u32 %v1123, 7
    %v1125 = vsub.s32 %v1122, %v1124
    %v1126 = vrot.slane %v1110, %v1125
    %v1128 = vunpack.c.l.s4 1966171168
    %v1129 = vunpack.c.0.s8 %v1128
    %v1130 = vlaneseq
    %v1131 = vshrl.u32 %v1130, 7
    %v1132 = vsub.s32 %v1129, %v1131
    %v1133 = vrot.slane %v1117, %v1132
    %v1135 = vunpack.c.l.s4 1966171168
    %v1136 = vunpack.c.0.s8 %v1135
    %v1137 = vlaneseq
    %v1138 = vshrl.u32 %v1137, 7
    %v1139 = vsub.s32 %v1136, %v1138
    %v1140 = vrot.slane %v1118, %v1139
    %v1142 = vunpack.c.l.s4 1966171168
    %v1143 = vunpack.c.0.s8 %v1142
    %v1144 = vlaneseq
    %v1145 = vshrl.u32 %v1144, 7
    %v1146 = vsub.s32 %v1143, %v1145
    %v1147 = vrot.slane %v1119, %v1146
    %v1148 = vcombine.high %v1126, %v1126
    %v1149 = vcombine.high %v1133, %v1133
    %v1150 = vcombine.high %v1140, %v1140
    %v1151 = vcombine.high %v1147, %v1147
    %v1152 = vlaneseq
    %v1153 = vshrl.u32 %v1152, 7
    %v1154 = vsub.s32 0, %v1153
    %v1155 = vrot.slane %v1076, %v1154
    %v1156 = vlaneseq
    %v1157 = vshrl.u32 %v1156, 7
    %v1158 = vsub.s32 1, %v1157
    %v1159 = vrot.slane %v1076, %v1158
    %v1160 = vlaneseq
    %v1161 = vshrl.u32 %v1160, 7
    %v1162 = vsub.s32 0, %v1161
    %v1163 = vrot.slane %v1090, %v1162
    %v1164 = vlaneseq
    %v1165 = vshrl.u32 %v1164, 7
    %v1166 = vsub.s32 1, %v1165
    %v1167 = vrot.slane %v1090, %v1166
    %v1168 = vlaneseq
    %v1169 = vshrl.u32 %v1168, 7
    %v1170 = vsub.s32 0, %v1169
    %v1171 = vrot.slane %v1098, %v1170
    %v1172 = vlaneseq
    %v1173 = vshrl.u32 %v1172, 7
    %v1174 = vsub.s32 1, %v1173
    %v1175 = vrot.slane %v1098, %v1174
    %v1176 = vlaneseq
    %v1177 = vshrl.u32 %v1176, 7
    %v1178 = vsub.s32 0, %v1177
    %v1179 = vrot.slane %v1100, %v1178
    %v1180 = vlaneseq
    %v1181 = vshrl.u32 %v1180, 7
    %v1182 = vsub.s32 1, %v1181
    %v1183 = vrot.slane %v1100, %v1182
    %v1184 = vlaneseq
    %v1185 = vshrl.u32 %v1184, 7
    %v1186 = vsub.s32 0, %v1185
    %v1187 = vrot.slane %v1083, %v1186
    %v1188 = vlaneseq
    %v1189 = vshrl.u32 %v1188, 7
    %v1190 = vsub.s32 1, %v1189
    %v1191 = vrot.slane %v1083, %v1190
    %v1192 = vlaneseq
    %v1193 = vshrl.u32 %v1192, 7
    %v1194 = vsub.s32 0, %v1193
    %v1195 = vrot.slane %v1097, %v1194
    %v1196 = vlaneseq
    %v1197 = vshrl.u32 %v1196, 7
    %v1198 = vsub.s32 1, %v1197
    %v1199 = vrot.slane %v1097, %v1198
    %v1200 = vlaneseq
    %v1201 = vshrl.u32 %v1200, 7
    %v1202 = vsub.s32 0, %v1201
    %v1203 = vrot.slane %v1099, %v1202
    %v1204 = vlaneseq
    %v1205 = vshrl.u32 %v1204, 7
    %v1206 = vsub.s32 1, %v1205
    %v1207 = vrot.slane %v1099, %v1206
    %v1208 = vlaneseq
    %v1209 = vshrl.u32 %v1208, 7
    %v1210 = vsub.s32 0, %v1209
    %v1211 = vrot.slane %v1101, %v1210
    %v1212 = vlaneseq
    %v1213 = vshrl.u32 %v1212, 7
    %v1214 = vsub.s32 1, %v1213
    %v1215 = vrot.slane %v1101, %v1214
    %v1216 = vlaneseq
    %v1217 = vshrl.u32 %v1216, 7
    %v1218 = vsub.s32 0, %v1217
    %v1219 = vrot.slane %v1126, %v1218
    %v1220 = vlaneseq
    %v1221 = vshrl.u32 %v1220, 7
    %v1222 = vsub.s32 1, %v1221
    %v1223 = vrot.slane %v1126, %v1222
    %v1224 = vlaneseq
    %v1225 = vshrl.u32 %v1224, 7
    %v1226 = vsub.s32 0, %v1225
    %v1227 = vrot.slane %v1140, %v1226
    %v1228 = vlaneseq
    %v1229 = vshrl.u32 %v1228, 7
    %v1230 = vsub.s32 1, %v1229
    %v1231 = vrot.slane %v1140, %v1230
    %v1232 = vlaneseq
    %v1233 = vshrl.u32 %v1232, 7
    %v1234 = vsub.s32 0, %v1233
    %v1235 = vrot.slane %v1148, %v1234
    %v1236 = vlaneseq
    %v1237 = vshrl.u32 %v1236, 7
    %v1238 = vsub.s32 1, %v1237
    %v1239 = vrot.slane %v1148, %v1238
    %v1240 = vlaneseq
    %v1241 = vshrl.u32 %v1240, 7
    %v1242 = vsub.s32 0, %v1241
    %v1243 = vrot.slane %v1150, %v1242
    %v1244 = vlaneseq
    %v1245 = vshrl.u32 %v1244, 7
    %v1246 = vsub.s32 1, %v1245
    %v1247 = vrot.slane %v1150, %v1246
    %v1248 = vlaneseq
    %v1249 = vshrl.u32 %v1248, 7
    %v1250 = vsub.s32 0, %v1249
    %v1251 = vrot.slane %v1133, %v1250
    %v1252 = vlaneseq
    %v1253 = vshrl.u32 %v1252, 7
    %v1254 = vsub.s32 1, %v1253
    %v1255 = vrot.slane %v1133, %v1254
    %v1256 = vlaneseq
    %v1257 = vshrl.u32 %v1256, 7
    %v1258 = vsub.s32 0, %v1257
    %v1259 = vrot.slane %v1147, %v1258
    %v1260 = vlaneseq
    %v1261 = vshrl.u32 %v1260, 7
    %v1262 = vsub.s32 1, %v1261
    %v1263 = vrot.slane %v1147, %v1262
    %v1264 = vlaneseq
    %v1265 = vshrl.u32 %v1264, 7
    %v1266 = vsub.s32 0, %v1265
    %v1267 = vrot.slane %v1149, %v1266
    %v1268 = vlaneseq
    %v1269 = vshrl.u32 %v1268, 7
    %v1270 = vsub.s32 1, %v1269
    %v1271 = vrot.slane %v1149, %v1270
    %v1272 = vlaneseq
    %v1273 = vshrl.u32 %v1272, 7
    %v1274 = vsub.s32 0, %v1273
    %v1275 = vrot.slane %v1151, %v1274
    %v1276 = vlaneseq
    %v1277 = vshrl.u32 %v1276, 7
    %v1278 = vsub.s32 1, %v1277
    %v1279 = vrot.slane %v1151, %v1278
    %v1312 = vmul.f32 %v1016, %v1155
    %v1313 = vmul.f32 %v1017, %v1159
    %v1314 = vmul.f32 %v1018, %v1163
    %v1315 = vmul.f32 %v1019, %v1167
    %v1316 = vmul.f32 %v1020, %v1171
    %v1317 = vmul.f32 %v1021, %v1175
    %v1318 = vmul.f32 %v1022, %v1179
    %v1319 = vmul.f32 %v1023, %v1183
    %v1320 = vmul.f32 %v1024, %v1187
    %v1321 = vmul.f32 %v1025, %v1191
    %v1322 = vmul.f32 %v1026, %v1195
    %v1323 = vmul.f32 %v1027, %v1199
    %v1324 = vmul.f32 %v1028, %v1203
    %v1325 = vmul.f32 %v1029, %v1207
    %v1326 = vmul.f32 %v1030, %v1211
    %v1327 = vmul.f32 %v1031, %v1215
    %v1328 = vmul.f32 %v1032, %v1219
    %v1329 = vmul.f32 %v1033, %v1223
    %v1330 = vmul.f32 %v1034, %v1227
    %v1331 = vmul.f32 %v1035, %v1231
    %v1332 = vmul.f32 %v1036, %v1235
    %v1333 = vmul.f32 %v1037, %v1239
    %v1334 = vmul.f32 %v1038, %v1243
    %v1335 = vmul.f32 %v1039, %v1247
    %v1336 = vmul.f32 %v1040, %v1251
    %v1337 = vmul.f32 %v1041, %v1255
    %v1338 = vmul.f32 %v1042, %v1259
    %v1339 = vmul.f32 %v1043, %v1263
    %v1340 = vmul.f32 %v1044, %v1267
    %v1341 = vmul.f32 %v1045, %v1271
    %v1342 = vmul.f32 %v1046, %v1275
    %v1343 = vmul.f32 %v1047, %v1279
    %v1344 = vadd.f32 %v1312, %v1313
    %1345 = vadd.xlane.f32.xlu0 %v1344
    %v1346 = vpop.xlane.xlu0 %1345
    %v1347 = vadd.f32 %v1314, %v1315
    %1348 = vadd.xlane.f32.xlu0 %v1347
    %v1349 = vpop.xlane.xlu0 %1348
    %v1350 = vadd.f32 %v1316, %v1317
    %1351 = vadd.xlane.f32.xlu0 %v1350
    %v1352 = vpop.xlane.xlu0 %1351
    %v1353 = vadd.f32 %v1318, %v1319
    %1354 = vadd.xlane.f32.xlu0 %v1353
    %v1355 = vpop.xlane.xlu0 %1354
    %v1356 = vadd.f32 %v1320, %v1321
    %1357 = vadd.xlane.f32.xlu0 %v1356
    %v1358 = vpop.xlane.xlu0 %1357
    %v1359 = vadd.f32 %v1322, %v1323
    %1360 = vadd.xlane.f32.xlu0 %v1359
    %v1361 = vpop.xlane.xlu0 %1360
    %v1362 = vadd.f32 %v1324, %v1325
    %1363 = vadd.xlane.f32.xlu0 %v1362
    %v1364 = vpop.xlane.xlu0 %1363
    %v1365 = vadd.f32 %v1326, %v1327
    %1366 = vadd.xlane.f32.xlu0 %v1365
    %v1367 = vpop.xlane.xlu0 %1366
    %v1368 = vadd.f32 %v1328, %v1329
    %1369 = vadd.xlane.f32.xlu0 %v1368
    %v1370 = vpop.xlane.xlu0 %1369
    %v1371 = vadd.f32 %v1330, %v1331
    %1372 = vadd.xlane.f32.xlu0 %v1371
    %v1373 = vpop.xlane.xlu0 %1372
    %v1374 = vadd.f32 %v1332, %v1333
    %1375 = vadd.xlane.f32.xlu0 %v1374
    %v1376 = vpop.xlane.xlu0 %1375
    %v1377 = vadd.f32 %v1334, %v1335
    %1378 = vadd.xlane.f32.xlu0 %v1377
    %v1379 = vpop.xlane.xlu0 %1378
    %v1380 = vadd.f32 %v1336, %v1337
    %1381 = vadd.xlane.f32.xlu0 %v1380
    %v1382 = vpop.xlane.xlu0 %1381
    %v1383 = vadd.f32 %v1338, %v1339
    %1384 = vadd.xlane.f32.xlu0 %v1383
    %v1385 = vpop.xlane.xlu0 %1384
    %v1386 = vadd.f32 %v1340, %v1341
    %1387 = vadd.xlane.f32.xlu0 %v1386
    %v1388 = vpop.xlane.xlu0 %1387
    %v1389 = vadd.f32 %v1342, %v1343
    %1390 = vadd.xlane.f32.xlu0 %v1389
    %v1391 = vpop.xlane.xlu0 %1390
    %v1392 = vadd.f32 %v1346, 0.0
    %v1393 = vadd.f32 %v1349, 0.0
    %v1394 = vadd.f32 %v1352, 0.0
    %v1395 = vadd.f32 %v1355, 0.0
    %v1396 = vadd.f32 %v1358, 0.0
    %v1397 = vadd.f32 %v1361, 0.0
    %v1398 = vadd.f32 %v1364, 0.0
    %v1399 = vadd.f32 %v1367, 0.0
    %v1400 = vadd.f32 %v1370, 0.0
    %v1401 = vadd.f32 %v1373, 0.0
    %v1402 = vadd.f32 %v1376, 0.0
    %v1403 = vadd.f32 %v1379, 0.0
    %v1404 = vadd.f32 %v1382, 0.0
    %v1405 = vadd.f32 %v1385, 0.0
    %v1406 = vadd.f32 %v1388, 0.0
    %v1407 = vadd.f32 %v1391, 0.0
    %v1408 = vld [vmem:[#allocation6 + $0x10] sm:$0xff]
    %v1409 = vld [vmem:[#allocation6 + $0x18] sm:$0xff]
    %v1410 = vld [vmem:[#allocation6 + $0x50] sm:$0xff]
    %v1411 = vld [vmem:[#allocation6 + $0x58] sm:$0xff]
    %v1412 = vld [vmem:[#allocation6 + $0x90] sm:$0xff]
    %v1413 = vld [vmem:[#allocation6 + $0x98] sm:$0xff]
    %v1414 = vld [vmem:[#allocation6 + $0xd0] sm:$0xff]
    %v1415 = vld [vmem:[#allocation6 + $0xd8] sm:$0xff]
    %v1416 = vld [vmem:[#allocation6 + $0x110] sm:$0xff]
    %v1417 = vld [vmem:[#allocation6 + $0x118] sm:$0xff]
    %v1418 = vld [vmem:[#allocation6 + $0x150] sm:$0xff]
    %v1419 = vld [vmem:[#allocation6 + $0x158] sm:$0xff]
    %v1420 = vld [vmem:[#allocation6 + $0x190] sm:$0xff]
    %v1421 = vld [vmem:[#allocation6 + $0x198] sm:$0xff]
    %v1422 = vld [vmem:[#allocation6 + $0x1d0] sm:$0xff]
    %v1423 = vld [vmem:[#allocation6 + $0x1d8] sm:$0xff]
    %v1424 = vld [vmem:[#allocation6 + $0x210] sm:$0xff]
    %v1425 = vld [vmem:[#allocation6 + $0x218] sm:$0xff]
    %v1426 = vld [vmem:[#allocation6 + $0x250] sm:$0xff]
    %v1427 = vld [vmem:[#allocation6 + $0x258] sm:$0xff]
    %v1428 = vld [vmem:[#allocation6 + $0x290] sm:$0xff]
    %v1429 = vld [vmem:[#allocation6 + $0x298] sm:$0xff]
    %v1430 = vld [vmem:[#allocation6 + $0x2d0] sm:$0xff]
    %v1431 = vld [vmem:[#allocation6 + $0x2d8] sm:$0xff]
    %v1432 = vld [vmem:[#allocation6 + $0x310] sm:$0xff]
    %v1433 = vld [vmem:[#allocation6 + $0x318] sm:$0xff]
    %v1434 = vld [vmem:[#allocation6 + $0x350] sm:$0xff]
    %v1435 = vld [vmem:[#allocation6 + $0x358] sm:$0xff]
    %v1436 = vld [vmem:[#allocation6 + $0x390] sm:$0xff]
    %v1437 = vld [vmem:[#allocation6 + $0x398] sm:$0xff]
    %v1438 = vld [vmem:[#allocation6 + $0x3d0] sm:$0xff]
    %v1439 = vld [vmem:[#allocation6 + $0x3d8] sm:$0xff]
    %v1444 = vcombine.low %v698, %v700
    %v1445 = vcombine.high %v698, %v700
    %v1447 = vunpack.c.l.s4 1966171168
    %v1448 = vunpack.c.0.s8 %v1447
    %v1449 = vlaneseq
    %v1450 = vshrl.u32 %v1449, 7
    %v1451 = vsub.s32 %v1448, %v1450
    %v1452 = vrot.slane %v1444, %v1451
    %v1454 = vunpack.c.l.s4 1966171168
    %v1455 = vunpack.c.0.s8 %v1454
    %v1456 = vlaneseq
    %v1457 = vshrl.u32 %v1456, 7
    %v1458 = vsub.s32 %v1455, %v1457
    %v1459 = vrot.slane %v1445, %v1458
    %v1460 = vcombine.high %v1452, %v1452
    %v1461 = vcombine.high %v1459, %v1459
    %v1463 = vunpack.c.l.s4 1966171168
    %v1464 = vunpack.c.0.s8 %v1463
    %v1465 = vlaneseq
    %v1466 = vshrl.u32 %v1465, 7
    %v1467 = vsub.s32 %v1464, %v1466
    %v1468 = vrot.slane %v1452, %v1467
    %v1470 = vunpack.c.l.s4 1966171168
    %v1471 = vunpack.c.0.s8 %v1470
    %v1472 = vlaneseq
    %v1473 = vshrl.u32 %v1472, 7
    %v1474 = vsub.s32 %v1471, %v1473
    %v1475 = vrot.slane %v1459, %v1474
    %v1477 = vunpack.c.l.s4 1966171168
    %v1478 = vunpack.c.0.s8 %v1477
    %v1479 = vlaneseq
    %v1480 = vshrl.u32 %v1479, 7
    %v1481 = vsub.s32 %v1478, %v1480
    %v1482 = vrot.slane %v1460, %v1481
    %v1484 = vunpack.c.l.s4 1966171168
    %v1485 = vunpack.c.0.s8 %v1484
    %v1486 = vlaneseq
    %v1487 = vshrl.u32 %v1486, 7
    %v1488 = vsub.s32 %v1485, %v1487
    %v1489 = vrot.slane %v1461, %v1488
    %v1490 = vcombine.high %v1468, %v1468
    %v1491 = vcombine.high %v1475, %v1475
    %v1492 = vcombine.high %v1482, %v1482
    %v1493 = vcombine.high %v1489, %v1489
    %v1494 = vcombine.low %v704, %v706
    %v1495 = vcombine.high %v704, %v706
    %v1497 = vunpack.c.l.s4 1966171168
    %v1498 = vunpack.c.0.s8 %v1497
    %v1499 = vlaneseq
    %v1500 = vshrl.u32 %v1499, 7
    %v1501 = vsub.s32 %v1498, %v1500
    %v1502 = vrot.slane %v1494, %v1501
    %v1504 = vunpack.c.l.s4 1966171168
    %v1505 = vunpack.c.0.s8 %v1504
    %v1506 = vlaneseq
    %v1507 = vshrl.u32 %v1506, 7
    %v1508 = vsub.s32 %v1505, %v1507
    %v1509 = vrot.slane %v1495, %v1508
    %v1510 = vcombine.high %v1502, %v1502
    %v1511 = vcombine.high %v1509, %v1509
    %v1513 = vunpack.c.l.s4 1966171168
    %v1514 = vunpack.c.0.s8 %v1513
    %v1515 = vlaneseq
    %v1516 = vshrl.u32 %v1515, 7
    %v1517 = vsub.s32 %v1514, %v1516
    %v1518 = vrot.slane %v1502, %v1517
    %v1520 = vunpack.c.l.s4 1966171168
    %v1521 = vunpack.c.0.s8 %v1520
    %v1522 = vlaneseq
    %v1523 = vshrl.u32 %v1522, 7
    %v1524 = vsub.s32 %v1521, %v1523
    %v1525 = vrot.slane %v1509, %v1524
    %v1527 = vunpack.c.l.s4 1966171168
    %v1528 = vunpack.c.0.s8 %v1527
    %v1529 = vlaneseq
    %v1530 = vshrl.u32 %v1529, 7
    %v1531 = vsub.s32 %v1528, %v1530
    %v1532 = vrot.slane %v1510, %v1531
    %v1534 = vunpack.c.l.s4 1966171168
    %v1535 = vunpack.c.0.s8 %v1534
    %v1536 = vlaneseq
    %v1537 = vshrl.u32 %v1536, 7
    %v1538 = vsub.s32 %v1535, %v1537
    %v1539 = vrot.slane %v1511, %v1538
    %v1540 = vcombine.high %v1518, %v1518
    %v1541 = vcombine.high %v1525, %v1525
    %v1542 = vcombine.high %v1532, %v1532
    %v1543 = vcombine.high %v1539, %v1539
    %v1544 = vlaneseq
    %v1545 = vshrl.u32 %v1544, 7
    %v1546 = vsub.s32 0, %v1545
    %v1547 = vrot.slane %v1468, %v1546
    %v1548 = vlaneseq
    %v1549 = vshrl.u32 %v1548, 7
    %v1550 = vsub.s32 1, %v1549
    %v1551 = vrot.slane %v1468, %v1550
    %v1552 = vlaneseq
    %v1553 = vshrl.u32 %v1552, 7
    %v1554 = vsub.s32 0, %v1553
    %v1555 = vrot.slane %v1482, %v1554
    %v1556 = vlaneseq
    %v1557 = vshrl.u32 %v1556, 7
    %v1558 = vsub.s32 1, %v1557
    %v1559 = vrot.slane %v1482, %v1558
    %v1560 = vlaneseq
    %v1561 = vshrl.u32 %v1560, 7
    %v1562 = vsub.s32 0, %v1561
    %v1563 = vrot.slane %v1490, %v1562
    %v1564 = vlaneseq
    %v1565 = vshrl.u32 %v1564, 7
    %v1566 = vsub.s32 1, %v1565
    %v1567 = vrot.slane %v1490, %v1566
    %v1568 = vlaneseq
    %v1569 = vshrl.u32 %v1568, 7
    %v1570 = vsub.s32 0, %v1569
    %v1571 = vrot.slane %v1492, %v1570
    %v1572 = vlaneseq
    %v1573 = vshrl.u32 %v1572, 7
    %v1574 = vsub.s32 1, %v1573
    %v1575 = vrot.slane %v1492, %v1574
    %v1576 = vlaneseq
    %v1577 = vshrl.u32 %v1576, 7
    %v1578 = vsub.s32 0, %v1577
    %v1579 = vrot.slane %v1475, %v1578
    %v1580 = vlaneseq
    %v1581 = vshrl.u32 %v1580, 7
    %v1582 = vsub.s32 1, %v1581
    %v1583 = vrot.slane %v1475, %v1582
    %v1584 = vlaneseq
    %v1585 = vshrl.u32 %v1584, 7
    %v1586 = vsub.s32 0, %v1585
    %v1587 = vrot.slane %v1489, %v1586
    %v1588 = vlaneseq
    %v1589 = vshrl.u32 %v1588, 7
    %v1590 = vsub.s32 1, %v1589
    %v1591 = vrot.slane %v1489, %v1590
    %v1592 = vlaneseq
    %v1593 = vshrl.u32 %v1592, 7
    %v1594 = vsub.s32 0, %v1593
    %v1595 = vrot.slane %v1491, %v1594
    %v1596 = vlaneseq
    %v1597 = vshrl.u32 %v1596, 7
    %v1598 = vsub.s32 1, %v1597
    %v1599 = vrot.slane %v1491, %v1598
    %v1600 = vlaneseq
    %v1601 = vshrl.u32 %v1600, 7
    %v1602 = vsub.s32 0, %v1601
    %v1603 = vrot.slane %v1493, %v1602
    %v1604 = vlaneseq
    %v1605 = vshrl.u32 %v1604, 7
    %v1606 = vsub.s32 1, %v1605
    %v1607 = vrot.slane %v1493, %v1606
    %v1608 = vlaneseq
    %v1609 = vshrl.u32 %v1608, 7
    %v1610 = vsub.s32 0, %v1609
    %v1611 = vrot.slane %v1518, %v1610
    %v1612 = vlaneseq
    %v1613 = vshrl.u32 %v1612, 7
    %v1614 = vsub.s32 1, %v1613
    %v1615 = vrot.slane %v1518, %v1614
    %v1616 = vlaneseq
    %v1617 = vshrl.u32 %v1616, 7
    %v1618 = vsub.s32 0, %v1617
    %v1619 = vrot.slane %v1532, %v1618
    %v1620 = vlaneseq
    %v1621 = vshrl.u32 %v1620, 7
    %v1622 = vsub.s32 1, %v1621
    %v1623 = vrot.slane %v1532, %v1622
    %v1624 = vlaneseq
    %v1625 = vshrl.u32 %v1624, 7
    %v1626 = vsub.s32 0, %v1625
    %v1627 = vrot.slane %v1540, %v1626
    %v1628 = vlaneseq
    %v1629 = vshrl.u32 %v1628, 7
    %v1630 = vsub.s32 1, %v1629
    %v1631 = vrot.slane %v1540, %v1630
    %v1632 = vlaneseq
    %v1633 = vshrl.u32 %v1632, 7
    %v1634 = vsub.s32 0, %v1633
    %v1635 = vrot.slane %v1542, %v1634
    %v1636 = vlaneseq
    %v1637 = vshrl.u32 %v1636, 7
    %v1638 = vsub.s32 1, %v1637
    %v1639 = vrot.slane %v1542, %v1638
    %v1640 = vlaneseq
    %v1641 = vshrl.u32 %v1640, 7
    %v1642 = vsub.s32 0, %v1641
    %v1643 = vrot.slane %v1525, %v1642
    %v1644 = vlaneseq
    %v1645 = vshrl.u32 %v1644, 7
    %v1646 = vsub.s32 1, %v1645
    %v1647 = vrot.slane %v1525, %v1646
    %v1648 = vlaneseq
    %v1649 = vshrl.u32 %v1648, 7
    %v1650 = vsub.s32 0, %v1649
    %v1651 = vrot.slane %v1539, %v1650
    %v1652 = vlaneseq
    %v1653 = vshrl.u32 %v1652, 7
    %v1654 = vsub.s32 1, %v1653
    %v1655 = vrot.slane %v1539, %v1654
    %v1656 = vlaneseq
    %v1657 = vshrl.u32 %v1656, 7
    %v1658 = vsub.s32 0, %v1657
    %v1659 = vrot.slane %v1541, %v1658
    %v1660 = vlaneseq
    %v1661 = vshrl.u32 %v1660, 7
    %v1662 = vsub.s32 1, %v1661
    %v1663 = vrot.slane %v1541, %v1662
    %v1664 = vlaneseq
    %v1665 = vshrl.u32 %v1664, 7
    %v1666 = vsub.s32 0, %v1665
    %v1667 = vrot.slane %v1543, %v1666
    %v1668 = vlaneseq
    %v1669 = vshrl.u32 %v1668, 7
    %v1670 = vsub.s32 1, %v1669
    %v1671 = vrot.slane %v1543, %v1670
    %v1704 = vmul.f32 %v1408, %v1547
    %v1705 = vmul.f32 %v1409, %v1551
    %v1706 = vmul.f32 %v1410, %v1555
    %v1707 = vmul.f32 %v1411, %v1559
    %v1708 = vmul.f32 %v1412, %v1563
    %v1709 = vmul.f32 %v1413, %v1567
    %v1710 = vmul.f32 %v1414, %v1571
    %v1711 = vmul.f32 %v1415, %v1575
    %v1712 = vmul.f32 %v1416, %v1579
    %v1713 = vmul.f32 %v1417, %v1583
    %v1714 = vmul.f32 %v1418, %v1587
    %v1715 = vmul.f32 %v1419, %v1591
    %v1716 = vmul.f32 %v1420, %v1595
    %v1717 = vmul.f32 %v1421, %v1599
    %v1718 = vmul.f32 %v1422, %v1603
    %v1719 = vmul.f32 %v1423, %v1607
    %v1720 = vmul.f32 %v1424, %v1611
    %v1721 = vmul.f32 %v1425, %v1615
    %v1722 = vmul.f32 %v1426, %v1619
    %v1723 = vmul.f32 %v1427, %v1623
    %v1724 = vmul.f32 %v1428, %v1627
    %v1725 = vmul.f32 %v1429, %v1631
    %v1726 = vmul.f32 %v1430, %v1635
    %v1727 = vmul.f32 %v1431, %v1639
    %v1728 = vmul.f32 %v1432, %v1643
    %v1729 = vmul.f32 %v1433, %v1647
    %v1730 = vmul.f32 %v1434, %v1651
    %v1731 = vmul.f32 %v1435, %v1655
    %v1732 = vmul.f32 %v1436, %v1659
    %v1733 = vmul.f32 %v1437, %v1663
    %v1734 = vmul.f32 %v1438, %v1667
    %v1735 = vmul.f32 %v1439, %v1671
    %v1736 = vadd.f32 %v1704, %v1705
    %1737 = vadd.xlane.f32.xlu0 %v1736
    %v1738 = vpop.xlane.xlu0 %1737
    %v1739 = vadd.f32 %v1706, %v1707
    %1740 = vadd.xlane.f32.xlu0 %v1739
    %v1741 = vpop.xlane.xlu0 %1740
    %v1742 = vadd.f32 %v1708, %v1709
    %1743 = vadd.xlane.f32.xlu0 %v1742
    %v1744 = vpop.xlane.xlu0 %1743
    %v1745 = vadd.f32 %v1710, %v1711
    %1746 = vadd.xlane.f32.xlu0 %v1745
    %v1747 = vpop.xlane.xlu0 %1746
    %v1748 = vadd.f32 %v1712, %v1713
    %1749 = vadd.xlane.f32.xlu0 %v1748
    %v1750 = vpop.xlane.xlu0 %1749
    %v1751 = vadd.f32 %v1714, %v1715
    %1752 = vadd.xlane.f32.xlu0 %v1751
    %v1753 = vpop.xlane.xlu0 %1752
    %v1754 = vadd.f32 %v1716, %v1717
    %1755 = vadd.xlane.f32.xlu0 %v1754
    %v1756 = vpop.xlane.xlu0 %1755
    %v1757 = vadd.f32 %v1718, %v1719
    %1758 = vadd.xlane.f32.xlu0 %v1757
    %v1759 = vpop.xlane.xlu0 %1758
    %v1760 = vadd.f32 %v1720, %v1721
    %1761 = vadd.xlane.f32.xlu0 %v1760
    %v1762 = vpop.xlane.xlu0 %1761
    %v1763 = vadd.f32 %v1722, %v1723
    %1764 = vadd.xlane.f32.xlu0 %v1763
    %v1765 = vpop.xlane.xlu0 %1764
    %v1766 = vadd.f32 %v1724, %v1725
    %1767 = vadd.xlane.f32.xlu0 %v1766
    %v1768 = vpop.xlane.xlu0 %1767
    %v1769 = vadd.f32 %v1726, %v1727
    %1770 = vadd.xlane.f32.xlu0 %v1769
    %v1771 = vpop.xlane.xlu0 %1770
    %v1772 = vadd.f32 %v1728, %v1729
    %1773 = vadd.xlane.f32.xlu0 %v1772
    %v1774 = vpop.xlane.xlu0 %1773
    %v1775 = vadd.f32 %v1730, %v1731
    %1776 = vadd.xlane.f32.xlu0 %v1775
    %v1777 = vpop.xlane.xlu0 %1776
    %v1778 = vadd.f32 %v1732, %v1733
    %1779 = vadd.xlane.f32.xlu0 %v1778
    %v1780 = vpop.xlane.xlu0 %1779
    %v1781 = vadd.f32 %v1734, %v1735
    %1782 = vadd.xlane.f32.xlu0 %v1781
    %v1783 = vpop.xlane.xlu0 %1782
    %v1784 = vadd.f32 %v1392, %v1738
    %v1785 = vadd.f32 %v1393, %v1741
    %v1786 = vadd.f32 %v1394, %v1744
    %v1787 = vadd.f32 %v1395, %v1747
    %v1788 = vadd.f32 %v1396, %v1750
    %v1789 = vadd.f32 %v1397, %v1753
    %v1790 = vadd.f32 %v1398, %v1756
    %v1791 = vadd.f32 %v1399, %v1759
    %v1792 = vadd.f32 %v1400, %v1762
    %v1793 = vadd.f32 %v1401, %v1765
    %v1794 = vadd.f32 %v1402, %v1768
    %v1795 = vadd.f32 %v1403, %v1771
    %v1796 = vadd.f32 %v1404, %v1774
    %v1797 = vadd.f32 %v1405, %v1777
    %v1798 = vadd.f32 %v1406, %v1780
    %v1799 = vadd.f32 %v1407, %v1783
    %v1800 = vld [vmem:[#allocation6 + $0x20] sm:$0xff]
    %v1801 = vld [vmem:[#allocation6 + $0x28] sm:$0xff]
    %v1802 = vld [vmem:[#allocation6 + $0x60] sm:$0xff]
    %v1803 = vld [vmem:[#allocation6 + $0x68] sm:$0xff]
    %v1804 = vld [vmem:[#allocation6 + $0xa0] sm:$0xff]
    %v1805 = vld [vmem:[#allocation6 + $0xa8] sm:$0xff]
    %v1806 = vld [vmem:[#allocation6 + $0xe0] sm:$0xff]
    %v1807 = vld [vmem:[#allocation6 + $0xe8] sm:$0xff]
    %v1808 = vld [vmem:[#allocation6 + $0x120] sm:$0xff]
    %v1809 = vld [vmem:[#allocation6 + $0x128] sm:$0xff]
    %v1810 = vld [vmem:[#allocation6 + $0x160] sm:$0xff]
    %v1811 = vld [vmem:[#allocation6 + $0x168] sm:$0xff]
    %v1812 = vld [vmem:[#allocation6 + $0x1a0] sm:$0xff]
    %v1813 = vld [vmem:[#allocation6 + $0x1a8] sm:$0xff]
    %v1814 = vld [vmem:[#allocation6 + $0x1e0] sm:$0xff]
    %v1815 = vld [vmem:[#allocation6 + $0x1e8] sm:$0xff]
    %v1816 = vld [vmem:[#allocation6 + $0x220] sm:$0xff]
    %v1817 = vld [vmem:[#allocation6 + $0x228] sm:$0xff]
    %v1818 = vld [vmem:[#allocation6 + $0x260] sm:$0xff]
    %v1819 = vld [vmem:[#allocation6 + $0x268] sm:$0xff]
    %v1820 = vld [vmem:[#allocation6 + $0x2a0] sm:$0xff]
    %v1821 = vld [vmem:[#allocation6 + $0x2a8] sm:$0xff]
    %v1822 = vld [vmem:[#allocation6 + $0x2e0] sm:$0xff]
    %v1823 = vld [vmem:[#allocation6 + $0x2e8] sm:$0xff]
    %v1824 = vld [vmem:[#allocation6 + $0x320] sm:$0xff]
    %v1825 = vld [vmem:[#allocation6 + $0x328] sm:$0xff]
    %v1826 = vld [vmem:[#allocation6 + $0x360] sm:$0xff]
    %v1827 = vld [vmem:[#allocation6 + $0x368] sm:$0xff]
    %v1828 = vld [vmem:[#allocation6 + $0x3a0] sm:$0xff]
    %v1829 = vld [vmem:[#allocation6 + $0x3a8] sm:$0xff]
    %v1830 = vld [vmem:[#allocation6 + $0x3e0] sm:$0xff]
    %v1831 = vld [vmem:[#allocation6 + $0x3e8] sm:$0xff]
    %v1836 = vcombine.low %v852, %v854
    %v1837 = vcombine.high %v852, %v854
    %v1839 = vunpack.c.l.s4 1966171168
    %v1840 = vunpack.c.0.s8 %v1839
    %v1841 = vlaneseq
    %v1842 = vshrl.u32 %v1841, 7
    %v1843 = vsub.s32 %v1840, %v1842
    %v1844 = vrot.slane %v1836, %v1843
    %v1846 = vunpack.c.l.s4 1966171168
    %v1847 = vunpack.c.0.s8 %v1846
    %v1848 = vlaneseq
    %v1849 = vshrl.u32 %v1848, 7
    %v1850 = vsub.s32 %v1847, %v1849
    %v1851 = vrot.slane %v1837, %v1850
    %v1852 = vcombine.high %v1844, %v1844
    %v1853 = vcombine.high %v1851, %v1851
    %v1855 = vunpack.c.l.s4 1966171168
    %v1856 = vunpack.c.0.s8 %v1855
    %v1857 = vlaneseq
    %v1858 = vshrl.u32 %v1857, 7
    %v1859 = vsub.s32 %v1856, %v1858
    %v1860 = vrot.slane %v1844, %v1859
    %v1862 = vunpack.c.l.s4 1966171168
    %v1863 = vunpack.c.0.s8 %v1862
    %v1864 = vlaneseq
    %v1865 = vshrl.u32 %v1864, 7
    %v1866 = vsub.s32 %v1863, %v1865
    %v1867 = vrot.slane %v1851, %v1866
    %v1869 = vunpack.c.l.s4 1966171168
    %v1870 = vunpack.c.0.s8 %v1869
    %v1871 = vlaneseq
    %v1872 = vshrl.u32 %v1871, 7
    %v1873 = vsub.s32 %v1870, %v1872
    %v1874 = vrot.slane %v1852, %v1873
    %v1876 = vunpack.c.l.s4 1966171168
    %v1877 = vunpack.c.0.s8 %v1876
    %v1878 = vlaneseq
    %v1879 = vshrl.u32 %v1878, 7
    %v1880 = vsub.s32 %v1877, %v1879
    %v1881 = vrot.slane %v1853, %v1880
    %v1882 = vcombine.high %v1860, %v1860
    %v1883 = vcombine.high %v1867, %v1867
    %v1884 = vcombine.high %v1874, %v1874
    %v1885 = vcombine.high %v1881, %v1881
    %v1886 = vcombine.low %v858, %v860
    %v1887 = vcombine.high %v858, %v860
    %v1889 = vunpack.c.l.s4 1966171168
    %v1890 = vunpack.c.0.s8 %v1889
    %v1891 = vlaneseq
    %v1892 = vshrl.u32 %v1891, 7
    %v1893 = vsub.s32 %v1890, %v1892
    %v1894 = vrot.slane %v1886, %v1893
    %v1896 = vunpack.c.l.s4 1966171168
    %v1897 = vunpack.c.0.s8 %v1896
    %v1898 = vlaneseq
    %v1899 = vshrl.u32 %v1898, 7
    %v1900 = vsub.s32 %v1897, %v1899
    %v1901 = vrot.slane %v1887, %v1900
    %v1902 = vcombine.high %v1894, %v1894
    %v1903 = vcombine.high %v1901, %v1901
    %v1905 = vunpack.c.l.s4 1966171168
    %v1906 = vunpack.c.0.s8 %v1905
    %v1907 = vlaneseq
    %v1908 = vshrl.u32 %v1907, 7
    %v1909 = vsub.s32 %v1906, %v1908
    %v1910 = vrot.slane %v1894, %v1909
    %v1912 = vunpack.c.l.s4 1966171168
    %v1913 = vunpack.c.0.s8 %v1912
    %v1914 = vlaneseq
    %v1915 = vshrl.u32 %v1914, 7
    %v1916 = vsub.s32 %v1913, %v1915
    %v1917 = vrot.slane %v1901, %v1916
    %v1919 = vunpack.c.l.s4 1966171168
    %v1920 = vunpack.c.0.s8 %v1919
    %v1921 = vlaneseq
    %v1922 = vshrl.u32 %v1921, 7
    %v1923 = vsub.s32 %v1920, %v1922
    %v1924 = vrot.slane %v1902, %v1923
    %v1926 = vunpack.c.l.s4 1966171168
    %v1927 = vunpack.c.0.s8 %v1926
    %v1928 = vlaneseq
    %v1929 = vshrl.u32 %v1928, 7
    %v1930 = vsub.s32 %v1927, %v1929
    %v1931 = vrot.slane %v1903, %v1930
    %v1932 = vcombine.high %v1910, %v1910
    %v1933 = vcombine.high %v1917, %v1917
    %v1934 = vcombine.high %v1924, %v1924
    %v1935 = vcombine.high %v1931, %v1931
    %v1936 = vlaneseq
    %v1937 = vshrl.u32 %v1936, 7
    %v1938 = vsub.s32 0, %v1937
    %v1939 = vrot.slane %v1860, %v1938
    %v1940 = vlaneseq
    %v1941 = vshrl.u32 %v1940, 7
    %v1942 = vsub.s32 1, %v1941
    %v1943 = vrot.slane %v1860, %v1942
    %v1944 = vlaneseq
    %v1945 = vshrl.u32 %v1944, 7
    %v1946 = vsub.s32 0, %v1945
    %v1947 = vrot.slane %v1874, %v1946
    %v1948 = vlaneseq
    %v1949 = vshrl.u32 %v1948, 7
    %v1950 = vsub.s32 1, %v1949
    %v1951 = vrot.slane %v1874, %v1950
    %v1952 = vlaneseq
    %v1953 = vshrl.u32 %v1952, 7
    %v1954 = vsub.s32 0, %v1953
    %v1955 = vrot.slane %v1882, %v1954
    %v1956 = vlaneseq
    %v1957 = vshrl.u32 %v1956, 7
    %v1958 = vsub.s32 1, %v1957
    %v1959 = vrot.slane %v1882, %v1958
    %v1960 = vlaneseq
    %v1961 = vshrl.u32 %v1960, 7
    %v1962 = vsub.s32 0, %v1961
    %v1963 = vrot.slane %v1884, %v1962
    %v1964 = vlaneseq
    %v1965 = vshrl.u32 %v1964, 7
    %v1966 = vsub.s32 1, %v1965
    %v1967 = vrot.slane %v1884, %v1966
    %v1968 = vlaneseq
    %v1969 = vshrl.u32 %v1968, 7
    %v1970 = vsub.s32 0, %v1969
    %v1971 = vrot.slane %v1867, %v1970
    %v1972 = vlaneseq
    %v1973 = vshrl.u32 %v1972, 7
    %v1974 = vsub.s32 1, %v1973
    %v1975 = vrot.slane %v1867, %v1974
    %v1976 = vlaneseq
    %v1977 = vshrl.u32 %v1976, 7
    %v1978 = vsub.s32 0, %v1977
    %v1979 = vrot.slane %v1881, %v1978
    %v1980 = vlaneseq
    %v1981 = vshrl.u32 %v1980, 7
    %v1982 = vsub.s32 1, %v1981
    %v1983 = vrot.slane %v1881, %v1982
    %v1984 = vlaneseq
    %v1985 = vshrl.u32 %v1984, 7
    %v1986 = vsub.s32 0, %v1985
    %v1987 = vrot.slane %v1883, %v1986
    %v1988 = vlaneseq
    %v1989 = vshrl.u32 %v1988, 7
    %v1990 = vsub.s32 1, %v1989
    %v1991 = vrot.slane %v1883, %v1990
    %v1992 = vlaneseq
    %v1993 = vshrl.u32 %v1992, 7
    %v1994 = vsub.s32 0, %v1993
    %v1995 = vrot.slane %v1885, %v1994
    %v1996 = vlaneseq
    %v1997 = vshrl.u32 %v1996, 7
    %v1998 = vsub.s32 1, %v1997
    %v1999 = vrot.slane %v1885, %v1998
    %v2000 = vlaneseq
    %v2001 = vshrl.u32 %v2000, 7
    %v2002 = vsub.s32 0, %v2001
    %v2003 = vrot.slane %v1910, %v2002
    %v2004 = vlaneseq
    %v2005 = vshrl.u32 %v2004, 7
    %v2006 = vsub.s32 1, %v2005
    %v2007 = vrot.slane %v1910, %v2006
    %v2008 = vlaneseq
    %v2009 = vshrl.u32 %v2008, 7
    %v2010 = vsub.s32 0, %v2009
    %v2011 = vrot.slane %v1924, %v2010
    %v2012 = vlaneseq
    %v2013 = vshrl.u32 %v2012, 7
    %v2014 = vsub.s32 1, %v2013
    %v2015 = vrot.slane %v1924, %v2014
    %v2016 = vlaneseq
    %v2017 = vshrl.u32 %v2016, 7
    %v2018 = vsub.s32 0, %v2017
    %v2019 = vrot.slane %v1932, %v2018
    %v2020 = vlaneseq
    %v2021 = vshrl.u32 %v2020, 7
    %v2022 = vsub.s32 1, %v2021
    %v2023 = vrot.slane %v1932, %v2022
    %v2024 = vlaneseq
    %v2025 = vshrl.u32 %v2024, 7
    %v2026 = vsub.s32 0, %v2025
    %v2027 = vrot.slane %v1934, %v2026
    %v2028 = vlaneseq
    %v2029 = vshrl.u32 %v2028, 7
    %v2030 = vsub.s32 1, %v2029
    %v2031 = vrot.slane %v1934, %v2030
    %v2032 = vlaneseq
    %v2033 = vshrl.u32 %v2032, 7
    %v2034 = vsub.s32 0, %v2033
    %v2035 = vrot.slane %v1917, %v2034
    %v2036 = vlaneseq
    %v2037 = vshrl.u32 %v2036, 7
    %v2038 = vsub.s32 1, %v2037
    %v2039 = vrot.slane %v1917, %v2038
    %v2040 = vlaneseq
    %v2041 = vshrl.u32 %v2040, 7
    %v2042 = vsub.s32 0, %v2041
    %v2043 = vrot.slane %v1931, %v2042
    %v2044 = vlaneseq
    %v2045 = vshrl.u32 %v2044, 7
    %v2046 = vsub.s32 1, %v2045
    %v2047 = vrot.slane %v1931, %v2046
    %v2048 = vlaneseq
    %v2049 = vshrl.u32 %v2048, 7
    %v2050 = vsub.s32 0, %v2049
    %v2051 = vrot.slane %v1933, %v2050
    %v2052 = vlaneseq
    %v2053 = vshrl.u32 %v2052, 7
    %v2054 = vsub.s32 1, %v2053
    %v2055 = vrot.slane %v1933, %v2054
    %v2056 = vlaneseq
    %v2057 = vshrl.u32 %v2056, 7
    %v2058 = vsub.s32 0, %v2057
    %v2059 = vrot.slane %v1935, %v2058
    %v2060 = vlaneseq
    %v2061 = vshrl.u32 %v2060, 7
    %v2062 = vsub.s32 1, %v2061
    %v2063 = vrot.slane %v1935, %v2062
    %v2096 = vmul.f32 %v1800, %v1939
    %v2097 = vmul.f32 %v1801, %v1943
    %v2098 = vmul.f32 %v1802, %v1947
    %v2099 = vmul.f32 %v1803, %v1951
    %v2100 = vmul.f32 %v1804, %v1955
    %v2101 = vmul.f32 %v1805, %v1959
    %v2102 = vmul.f32 %v1806, %v1963
    %v2103 = vmul.f32 %v1807, %v1967
    %v2104 = vmul.f32 %v1808, %v1971
    %v2105 = vmul.f32 %v1809, %v1975
    %v2106 = vmul.f32 %v1810, %v1979
    %v2107 = vmul.f32 %v1811, %v1983
    %v2108 = vmul.f32 %v1812, %v1987
    %v2109 = vmul.f32 %v1813, %v1991
    %v2110 = vmul.f32 %v1814, %v1995
    %v2111 = vmul.f32 %v1815, %v1999
    %v2112 = vmul.f32 %v1816, %v2003
    %v2113 = vmul.f32 %v1817, %v2007
    %v2114 = vmul.f32 %v1818, %v2011
    %v2115 = vmul.f32 %v1819, %v2015
    %v2116 = vmul.f32 %v1820, %v2019
    %v2117 = vmul.f32 %v1821, %v2023
    %v2118 = vmul.f32 %v1822, %v2027
    %v2119 = vmul.f32 %v1823, %v2031
    %v2120 = vmul.f32 %v1824, %v2035
    %v2121 = vmul.f32 %v1825, %v2039
    %v2122 = vmul.f32 %v1826, %v2043
    %v2123 = vmul.f32 %v1827, %v2047
    %v2124 = vmul.f32 %v1828, %v2051
    %v2125 = vmul.f32 %v1829, %v2055
    %v2126 = vmul.f32 %v1830, %v2059
    %v2127 = vmul.f32 %v1831, %v2063
    %v2128 = vadd.f32 %v2096, %v2097
    %2129 = vadd.xlane.f32.xlu0 %v2128
    %v2130 = vpop.xlane.xlu0 %2129
    %v2131 = vadd.f32 %v2098, %v2099
    %2132 = vadd.xlane.f32.xlu0 %v2131
    %v2133 = vpop.xlane.xlu0 %2132
    %v2134 = vadd.f32 %v2100, %v2101
    %2135 = vadd.xlane.f32.xlu0 %v2134
    %v2136 = vpop.xlane.xlu0 %2135
    %v2137 = vadd.f32 %v2102, %v2103
    %2138 = vadd.xlane.f32.xlu0 %v2137
    %v2139 = vpop.xlane.xlu0 %2138
    %v2140 = vadd.f32 %v2104, %v2105
    %2141 = vadd.xlane.f32.xlu0 %v2140
    %v2142 = vpop.xlane.xlu0 %2141
    %v2143 = vadd.f32 %v2106, %v2107
    %2144 = vadd.xlane.f32.xlu0 %v2143
    %v2145 = vpop.xlane.xlu0 %2144
    %v2146 = vadd.f32 %v2108, %v2109
    %2147 = vadd.xlane.f32.xlu0 %v2146
    %v2148 = vpop.xlane.xlu0 %2147
    %v2149 = vadd.f32 %v2110, %v2111
    %2150 = vadd.xlane.f32.xlu0 %v2149
    %v2151 = vpop.xlane.xlu0 %2150
    %v2152 = vadd.f32 %v2112, %v2113
    %2153 = vadd.xlane.f32.xlu0 %v2152
    %v2154 = vpop.xlane.xlu0 %2153
    %v2155 = vadd.f32 %v2114, %v2115
    %2156 = vadd.xlane.f32.xlu0 %v2155
    %v2157 = vpop.xlane.xlu0 %2156
    %v2158 = vadd.f32 %v2116, %v2117
    %2159 = vadd.xlane.f32.xlu0 %v2158
    %v2160 = vpop.xlane.xlu0 %2159
    %v2161 = vadd.f32 %v2118, %v2119
    %2162 = vadd.xlane.f32.xlu0 %v2161
    %v2163 = vpop.xlane.xlu0 %2162
    %v2164 = vadd.f32 %v2120, %v2121
    %2165 = vadd.xlane.f32.xlu0 %v2164
    %v2166 = vpop.xlane.xlu0 %2165
    %v2167 = vadd.f32 %v2122, %v2123
    %2168 = vadd.xlane.f32.xlu0 %v2167
    %v2169 = vpop.xlane.xlu0 %2168
    %v2170 = vadd.f32 %v2124, %v2125
    %2171 = vadd.xlane.f32.xlu0 %v2170
    %v2172 = vpop.xlane.xlu0 %2171
    %v2173 = vadd.f32 %v2126, %v2127
    %2174 = vadd.xlane.f32.xlu0 %v2173
    %v2175 = vpop.xlane.xlu0 %2174
    %v2176 = vadd.f32 %v1784, %v2130
    %v2177 = vadd.f32 %v1785, %v2133
    %v2178 = vadd.f32 %v1786, %v2136
    %v2179 = vadd.f32 %v1787, %v2139
    %v2180 = vadd.f32 %v1788, %v2142
    %v2181 = vadd.f32 %v1789, %v2145
    %v2182 = vadd.f32 %v1790, %v2148
    %v2183 = vadd.f32 %v1791, %v2151
    %v2184 = vadd.f32 %v1792, %v2154
    %v2185 = vadd.f32 %v1793, %v2157
    %v2186 = vadd.f32 %v1794, %v2160
    %v2187 = vadd.f32 %v1795, %v2163
    %v2188 = vadd.f32 %v1796, %v2166
    %v2189 = vadd.f32 %v1797, %v2169
    %v2190 = vadd.f32 %v1798, %v2172
    %v2191 = vadd.f32 %v1799, %v2175
    %v2192 = vld [vmem:[#allocation6 + $0x30] sm:$0xff]
    %v2193 = vld [vmem:[#allocation6 + $0x38] sm:$0xff]
    %v2194 = vld [vmem:[#allocation6 + $0x70] sm:$0xff]
    %v2195 = vld [vmem:[#allocation6 + $0x78] sm:$0xff]
    %v2196 = vld [vmem:[#allocation6 + $0xb0] sm:$0xff]
    %v2197 = vld [vmem:[#allocation6 + $0xb8] sm:$0xff]
    %v2198 = vld [vmem:[#allocation6 + $0xf0] sm:$0xff]
    %v2199 = vld [vmem:[#allocation6 + $0xf8] sm:$0xff]
    %v2200 = vld [vmem:[#allocation6 + $0x130] sm:$0xff]
    %v2201 = vld [vmem:[#allocation6 + $0x138] sm:$0xff]
    %v2202 = vld [vmem:[#allocation6 + $0x170] sm:$0xff]
    %v2203 = vld [vmem:[#allocation6 + $0x178] sm:$0xff]
    %v2204 = vld [vmem:[#allocation6 + $0x1b0] sm:$0xff]
    %v2205 = vld [vmem:[#allocation6 + $0x1b8] sm:$0xff]
    %v2206 = vld [vmem:[#allocation6 + $0x1f0] sm:$0xff]
    %v2207 = vld [vmem:[#allocation6 + $0x1f8] sm:$0xff]
    %v2208 = vld [vmem:[#allocation6 + $0x230] sm:$0xff]
    %v2209 = vld [vmem:[#allocation6 + $0x238] sm:$0xff]
    %v2210 = vld [vmem:[#allocation6 + $0x270] sm:$0xff]
    %v2211 = vld [vmem:[#allocation6 + $0x278] sm:$0xff]
    %v2212 = vld [vmem:[#allocation6 + $0x2b0] sm:$0xff]
    %v2213 = vld [vmem:[#allocation6 + $0x2b8] sm:$0xff]
    %v2214 = vld [vmem:[#allocation6 + $0x2f0] sm:$0xff]
    %v2215 = vld [vmem:[#allocation6 + $0x2f8] sm:$0xff]
    %v2216 = vld [vmem:[#allocation6 + $0x330] sm:$0xff]
    %v2217 = vld [vmem:[#allocation6 + $0x338] sm:$0xff]
    %v2218 = vld [vmem:[#allocation6 + $0x370] sm:$0xff]
    %v2219 = vld [vmem:[#allocation6 + $0x378] sm:$0xff]
    %v2220 = vld [vmem:[#allocation6 + $0x3b0] sm:$0xff]
    %v2221 = vld [vmem:[#allocation6 + $0x3b8] sm:$0xff]
    %v2222 = vld [vmem:[#allocation6 + $0x3f0] sm:$0xff]
    %v2223 = vld [vmem:[#allocation6 + $0x3f8] sm:$0xff]
    %v2228 = vcombine.low %v1006, %v1008
    %v2229 = vcombine.high %v1006, %v1008
    %v2231 = vunpack.c.l.s4 1966171168
    %v2232 = vunpack.c.0.s8 %v2231
    %v2233 = vlaneseq
    %v2234 = vshrl.u32 %v2233, 7
    %v2235 = vsub.s32 %v2232, %v2234
    %v2236 = vrot.slane %v2228, %v2235
    %v2238 = vunpack.c.l.s4 1966171168
    %v2239 = vunpack.c.0.s8 %v2238
    %v2240 = vlaneseq
    %v2241 = vshrl.u32 %v2240, 7
    %v2242 = vsub.s32 %v2239, %v2241
    %v2243 = vrot.slane %v2229, %v2242
    %v2244 = vcombine.high %v2236, %v2236
    %v2245 = vcombine.high %v2243, %v2243
    %v2247 = vunpack.c.l.s4 1966171168
    %v2248 = vunpack.c.0.s8 %v2247
    %v2249 = vlaneseq
    %v2250 = vshrl.u32 %v2249, 7
    %v2251 = vsub.s32 %v2248, %v2250
    %v2252 = vrot.slane %v2236, %v2251
    %v2254 = vunpack.c.l.s4 1966171168
    %v2255 = vunpack.c.0.s8 %v2254
    %v2256 = vlaneseq
    %v2257 = vshrl.u32 %v2256, 7
    %v2258 = vsub.s32 %v2255, %v2257
    %v2259 = vrot.slane %v2243, %v2258
    %v2261 = vunpack.c.l.s4 1966171168
    %v2262 = vunpack.c.0.s8 %v2261
    %v2263 = vlaneseq
    %v2264 = vshrl.u32 %v2263, 7
    %v2265 = vsub.s32 %v2262, %v2264
    %v2266 = vrot.slane %v2244, %v2265
    %v2268 = vunpack.c.l.s4 1966171168
    %v2269 = vunpack.c.0.s8 %v2268
    %v2270 = vlaneseq
    %v2271 = vshrl.u32 %v2270, 7
    %v2272 = vsub.s32 %v2269, %v2271
    %v2273 = vrot.slane %v2245, %v2272
    %v2274 = vcombine.high %v2252, %v2252
    %v2275 = vcombine.high %v2259, %v2259
    %v2276 = vcombine.high %v2266, %v2266
    %v2277 = vcombine.high %v2273, %v2273
    %v2278 = vcombine.low %v1012, %v1014
    %v2279 = vcombine.high %v1012, %v1014
    %v2281 = vunpack.c.l.s4 1966171168
    %v2282 = vunpack.c.0.s8 %v2281
    %v2283 = vlaneseq
    %v2284 = vshrl.u32 %v2283, 7
    %v2285 = vsub.s32 %v2282, %v2284
    %v2286 = vrot.slane %v2278, %v2285
    %v2288 = vunpack.c.l.s4 1966171168
    %v2289 = vunpack.c.0.s8 %v2288
    %v2290 = vlaneseq
    %v2291 = vshrl.u32 %v2290, 7
    %v2292 = vsub.s32 %v2289, %v2291
    %v2293 = vrot.slane %v2279, %v2292
    %v2294 = vcombine.high %v2286, %v2286
    %v2295 = vcombine.high %v2293, %v2293
    %v2297 = vunpack.c.l.s4 1966171168
    %v2298 = vunpack.c.0.s8 %v2297
    %v2299 = vlaneseq
    %v2300 = vshrl.u32 %v2299, 7
    %v2301 = vsub.s32 %v2298, %v2300
    %v2302 = vrot.slane %v2286, %v2301
    %v2304 = vunpack.c.l.s4 1966171168
    %v2305 = vunpack.c.0.s8 %v2304
    %v2306 = vlaneseq
    %v2307 = vshrl.u32 %v2306, 7
    %v2308 = vsub.s32 %v2305, %v2307
    %v2309 = vrot.slane %v2293, %v2308
    %v2311 = vunpack.c.l.s4 1966171168
    %v2312 = vunpack.c.0.s8 %v2311
    %v2313 = vlaneseq
    %v2314 = vshrl.u32 %v2313, 7
    %v2315 = vsub.s32 %v2312, %v2314
    %v2316 = vrot.slane %v2294, %v2315
    %v2318 = vunpack.c.l.s4 1966171168
    %v2319 = vunpack.c.0.s8 %v2318
    %v2320 = vlaneseq
    %v2321 = vshrl.u32 %v2320, 7
    %v2322 = vsub.s32 %v2319, %v2321
    %v2323 = vrot.slane %v2295, %v2322
    %v2324 = vcombine.high %v2302, %v2302
    %v2325 = vcombine.high %v2309, %v2309
    %v2326 = vcombine.high %v2316, %v2316
    %v2327 = vcombine.high %v2323, %v2323
    %v2328 = vlaneseq
    %v2329 = vshrl.u32 %v2328, 7
    %v2330 = vsub.s32 0, %v2329
    %v2331 = vrot.slane %v2252, %v2330
    %v2332 = vlaneseq
    %v2333 = vshrl.u32 %v2332, 7
    %v2334 = vsub.s32 1, %v2333
    %v2335 = vrot.slane %v2252, %v2334
    %v2336 = vlaneseq
    %v2337 = vshrl.u32 %v2336, 7
    %v2338 = vsub.s32 0, %v2337
    %v2339 = vrot.slane %v2266, %v2338
    %v2340 = vlaneseq
    %v2341 = vshrl.u32 %v2340, 7
    %v2342 = vsub.s32 1, %v2341
    %v2343 = vrot.slane %v2266, %v2342
    %v2344 = vlaneseq
    %v2345 = vshrl.u32 %v2344, 7
    %v2346 = vsub.s32 0, %v2345
    %v2347 = vrot.slane %v2274, %v2346
    %v2348 = vlaneseq
    %v2349 = vshrl.u32 %v2348, 7
    %v2350 = vsub.s32 1, %v2349
    %v2351 = vrot.slane %v2274, %v2350
    %v2352 = vlaneseq
    %v2353 = vshrl.u32 %v2352, 7
    %v2354 = vsub.s32 0, %v2353
    %v2355 = vrot.slane %v2276, %v2354
    %v2356 = vlaneseq
    %v2357 = vshrl.u32 %v2356, 7
    %v2358 = vsub.s32 1, %v2357
    %v2359 = vrot.slane %v2276, %v2358
    %v2360 = vlaneseq
    %v2361 = vshrl.u32 %v2360, 7
    %v2362 = vsub.s32 0, %v2361
    %v2363 = vrot.slane %v2259, %v2362
    %v2364 = vlaneseq
    %v2365 = vshrl.u32 %v2364, 7
    %v2366 = vsub.s32 1, %v2365
    %v2367 = vrot.slane %v2259, %v2366
    %v2368 = vlaneseq
    %v2369 = vshrl.u32 %v2368, 7
    %v2370 = vsub.s32 0, %v2369
    %v2371 = vrot.slane %v2273, %v2370
    %v2372 = vlaneseq
    %v2373 = vshrl.u32 %v2372, 7
    %v2374 = vsub.s32 1, %v2373
    %v2375 = vrot.slane %v2273, %v2374
    %v2376 = vlaneseq
    %v2377 = vshrl.u32 %v2376, 7
    %v2378 = vsub.s32 0, %v2377
    %v2379 = vrot.slane %v2275, %v2378
    %v2380 = vlaneseq
    %v2381 = vshrl.u32 %v2380, 7
    %v2382 = vsub.s32 1, %v2381
    %v2383 = vrot.slane %v2275, %v2382
    %v2384 = vlaneseq
    %v2385 = vshrl.u32 %v2384, 7
    %v2386 = vsub.s32 0, %v2385
    %v2387 = vrot.slane %v2277, %v2386
    %v2388 = vlaneseq
    %v2389 = vshrl.u32 %v2388, 7
    %v2390 = vsub.s32 1, %v2389
    %v2391 = vrot.slane %v2277, %v2390
    %v2392 = vlaneseq
    %v2393 = vshrl.u32 %v2392, 7
    %v2394 = vsub.s32 0, %v2393
    %v2395 = vrot.slane %v2302, %v2394
    %v2396 = vlaneseq
    %v2397 = vshrl.u32 %v2396, 7
    %v2398 = vsub.s32 1, %v2397
    %v2399 = vrot.slane %v2302, %v2398
    %v2400 = vlaneseq
    %v2401 = vshrl.u32 %v2400, 7
    %v2402 = vsub.s32 0, %v2401
    %v2403 = vrot.slane %v2316, %v2402
    %v2404 = vlaneseq
    %v2405 = vshrl.u32 %v2404, 7
    %v2406 = vsub.s32 1, %v2405
    %v2407 = vrot.slane %v2316, %v2406
    %v2408 = vlaneseq
    %v2409 = vshrl.u32 %v2408, 7
    %v2410 = vsub.s32 0, %v2409
    %v2411 = vrot.slane %v2324, %v2410
    %v2412 = vlaneseq
    %v2413 = vshrl.u32 %v2412, 7
    %v2414 = vsub.s32 1, %v2413
    %v2415 = vrot.slane %v2324, %v2414
    %v2416 = vlaneseq
    %v2417 = vshrl.u32 %v2416, 7
    %v2418 = vsub.s32 0, %v2417
    %v2419 = vrot.slane %v2326, %v2418
    %v2420 = vlaneseq
    %v2421 = vshrl.u32 %v2420, 7
    %v2422 = vsub.s32 1, %v2421
    %v2423 = vrot.slane %v2326, %v2422
    %v2424 = vlaneseq
    %v2425 = vshrl.u32 %v2424, 7
    %v2426 = vsub.s32 0, %v2425
    %v2427 = vrot.slane %v2309, %v2426
    %v2428 = vlaneseq
    %v2429 = vshrl.u32 %v2428, 7
    %v2430 = vsub.s32 1, %v2429
    %v2431 = vrot.slane %v2309, %v2430
    %v2432 = vlaneseq
    %v2433 = vshrl.u32 %v2432, 7
    %v2434 = vsub.s32 0, %v2433
    %v2435 = vrot.slane %v2323, %v2434
    %v2436 = vlaneseq
    %v2437 = vshrl.u32 %v2436, 7
    %v2438 = vsub.s32 1, %v2437
    %v2439 = vrot.slane %v2323, %v2438
    %v2440 = vlaneseq
    %v2441 = vshrl.u32 %v2440, 7
    %v2442 = vsub.s32 0, %v2441
    %v2443 = vrot.slane %v2325, %v2442
    %v2444 = vlaneseq
    %v2445 = vshrl.u32 %v2444, 7
    %v2446 = vsub.s32 1, %v2445
    %v2447 = vrot.slane %v2325, %v2446
    %v2448 = vlaneseq
    %v2449 = vshrl.u32 %v2448, 7
    %v2450 = vsub.s32 0, %v2449
    %v2451 = vrot.slane %v2327, %v2450
    %v2452 = vlaneseq
    %v2453 = vshrl.u32 %v2452, 7
    %v2454 = vsub.s32 1, %v2453
    %v2455 = vrot.slane %v2327, %v2454
    %v2488 = vmul.f32 %v2192, %v2331
    %v2489 = vmul.f32 %v2193, %v2335
    %v2490 = vmul.f32 %v2194, %v2339
    %v2491 = vmul.f32 %v2195, %v2343
    %v2492 = vmul.f32 %v2196, %v2347
    %v2493 = vmul.f32 %v2197, %v2351
    %v2494 = vmul.f32 %v2198, %v2355
    %v2495 = vmul.f32 %v2199, %v2359
    %v2496 = vmul.f32 %v2200, %v2363
    %v2497 = vmul.f32 %v2201, %v2367
    %v2498 = vmul.f32 %v2202, %v2371
    %v2499 = vmul.f32 %v2203, %v2375
    %v2500 = vmul.f32 %v2204, %v2379
    %v2501 = vmul.f32 %v2205, %v2383
    %v2502 = vmul.f32 %v2206, %v2387
    %v2503 = vmul.f32 %v2207, %v2391
    %v2504 = vmul.f32 %v2208, %v2395
    %v2505 = vmul.f32 %v2209, %v2399
    %v2506 = vmul.f32 %v2210, %v2403
    %v2507 = vmul.f32 %v2211, %v2407
    %v2508 = vmul.f32 %v2212, %v2411
    %v2509 = vmul.f32 %v2213, %v2415
    %v2510 = vmul.f32 %v2214, %v2419
    %v2511 = vmul.f32 %v2215, %v2423
    %v2512 = vmul.f32 %v2216, %v2427
    %v2513 = vmul.f32 %v2217, %v2431
    %v2514 = vmul.f32 %v2218, %v2435
    %v2515 = vmul.f32 %v2219, %v2439
    %v2516 = vmul.f32 %v2220, %v2443
    %v2517 = vmul.f32 %v2221, %v2447
    %v2518 = vmul.f32 %v2222, %v2451
    %v2519 = vmul.f32 %v2223, %v2455
    %v2520 = vadd.f32 %v2488, %v2489
    %2521 = vadd.xlane.f32.xlu0 %v2520
    %v2522 = vpop.xlane.xlu0 %2521
    %v2523 = vadd.f32 %v2490, %v2491
    %2524 = vadd.xlane.f32.xlu0 %v2523
    %v2525 = vpop.xlane.xlu0 %2524
    %v2526 = vadd.f32 %v2492, %v2493
    %2527 = vadd.xlane.f32.xlu0 %v2526
    %v2528 = vpop.xlane.xlu0 %2527
    %v2529 = vadd.f32 %v2494, %v2495
    %2530 = vadd.xlane.f32.xlu0 %v2529
    %v2531 = vpop.xlane.xlu0 %2530
    %v2532 = vadd.f32 %v2496, %v2497
    %2533 = vadd.xlane.f32.xlu0 %v2532
    %v2534 = vpop.xlane.xlu0 %2533
    %v2535 = vadd.f32 %v2498, %v2499
    %2536 = vadd.xlane.f32.xlu0 %v2535
    %v2537 = vpop.xlane.xlu0 %2536
    %v2538 = vadd.f32 %v2500, %v2501
    %2539 = vadd.xlane.f32.xlu0 %v2538
    %v2540 = vpop.xlane.xlu0 %2539
    %v2541 = vadd.f32 %v2502, %v2503
    %2542 = vadd.xlane.f32.xlu0 %v2541
    %v2543 = vpop.xlane.xlu0 %2542
    %v2544 = vadd.f32 %v2504, %v2505
    %2545 = vadd.xlane.f32.xlu0 %v2544
    %v2546 = vpop.xlane.xlu0 %2545
    %v2547 = vadd.f32 %v2506, %v2507
    %2548 = vadd.xlane.f32.xlu0 %v2547
    %v2549 = vpop.xlane.xlu0 %2548
    %v2550 = vadd.f32 %v2508, %v2509
    %2551 = vadd.xlane.f32.xlu0 %v2550
    %v2552 = vpop.xlane.xlu0 %2551
    %v2553 = vadd.f32 %v2510, %v2511
    %2554 = vadd.xlane.f32.xlu0 %v2553
    %v2555 = vpop.xlane.xlu0 %2554
    %v2556 = vadd.f32 %v2512, %v2513
    %2557 = vadd.xlane.f32.xlu0 %v2556
    %v2558 = vpop.xlane.xlu0 %2557
    %v2559 = vadd.f32 %v2514, %v2515
    %2560 = vadd.xlane.f32.xlu0 %v2559
    %v2561 = vpop.xlane.xlu0 %2560
    %v2562 = vadd.f32 %v2516, %v2517
    %2563 = vadd.xlane.f32.xlu0 %v2562
    %v2564 = vpop.xlane.xlu0 %2563
    %v2565 = vadd.f32 %v2518, %v2519
    %2566 = vadd.xlane.f32.xlu0 %v2565
    %v2567 = vpop.xlane.xlu0 %2566
    %v2568 = vadd.f32 %v2176, %v2522
    %v2569 = vadd.f32 %v2177, %v2525
    %v2570 = vadd.f32 %v2178, %v2528
    %v2571 = vadd.f32 %v2179, %v2531
    %v2572 = vadd.f32 %v2180, %v2534
    %v2573 = vadd.f32 %v2181, %v2537
    %v2574 = vadd.f32 %v2182, %v2540
    %v2575 = vadd.f32 %v2183, %v2543
    %v2576 = vadd.f32 %v2184, %v2546
    %v2577 = vadd.f32 %v2185, %v2549
    %v2578 = vadd.f32 %v2186, %v2552
    %v2579 = vadd.f32 %v2187, %v2555
    %v2580 = vadd.f32 %v2188, %v2558
    %v2581 = vadd.f32 %v2189, %v2561
    %v2582 = vadd.f32 %v2190, %v2564
    %v2583 = vadd.f32 %v2191, %v2567
    %v2584 = vld [vmem:[%s3] sm:$0xff]
    %v2585 = vld [vmem:[%s3 + $0x8] sm:$0xff]
    %vm2586 = vcmp.ne.s32.totalorder %v2584, 0
    %vm2587 = vcmp.ne.s32.totalorder %v2585, 0
    %v2604 = vlaneseq
    %v2605 = vand.u32 %v2604, 127
    %v2606 = vlaneseq
    %v2607 = vshrl.u32 %v2606, 7
    %v2608 = vsub.s32 %v2605, %v2607
    %v2609 = vrot.slane %v2568, %v2608
    %v2610 = vlaneseq
    %v2611 = vshrl.u32 %v2610, 7
    %v2612 = vsub.s32 %v2605, %v2611
    %v2613 = vrot.slane %v2569, %v2612
    %v2614 = vlaneseq
    %v2615 = vshrl.u32 %v2614, 7
    %v2616 = vsub.s32 %v2605, %v2615
    %v2617 = vrot.slane %v2570, %v2616
    %v2618 = vlaneseq
    %v2619 = vshrl.u32 %v2618, 7
    %v2620 = vsub.s32 %v2605, %v2619
    %v2621 = vrot.slane %v2571, %v2620
    %v2622 = vlaneseq
    %v2623 = vshrl.u32 %v2622, 7
    %v2624 = vsub.s32 %v2605, %v2623
    %v2625 = vrot.slane %v2572, %v2624
    %v2626 = vlaneseq
    %v2627 = vshrl.u32 %v2626, 7
    %v2628 = vsub.s32 %v2605, %v2627
    %v2629 = vrot.slane %v2573, %v2628
    %v2630 = vlaneseq
    %v2631 = vshrl.u32 %v2630, 7
    %v2632 = vsub.s32 %v2605, %v2631
    %v2633 = vrot.slane %v2574, %v2632
    %v2634 = vlaneseq
    %v2635 = vshrl.u32 %v2634, 7
    %v2636 = vsub.s32 %v2605, %v2635
    %v2637 = vrot.slane %v2575, %v2636
    %v2638 = vlaneseq
    %v2639 = vshrl.u32 %v2638, 7
    %v2640 = vsub.s32 %v2605, %v2639
    %v2641 = vrot.slane %v2576, %v2640
    %v2642 = vlaneseq
    %v2643 = vshrl.u32 %v2642, 7
    %v2644 = vsub.s32 %v2605, %v2643
    %v2645 = vrot.slane %v2577, %v2644
    %v2646 = vlaneseq
    %v2647 = vshrl.u32 %v2646, 7
    %v2648 = vsub.s32 %v2605, %v2647
    %v2649 = vrot.slane %v2578, %v2648
    %v2650 = vlaneseq
    %v2651 = vshrl.u32 %v2650, 7
    %v2652 = vsub.s32 %v2605, %v2651
    %v2653 = vrot.slane %v2579, %v2652
    %v2654 = vlaneseq
    %v2655 = vshrl.u32 %v2654, 7
    %v2656 = vsub.s32 %v2605, %v2655
    %v2657 = vrot.slane %v2580, %v2656
    %v2658 = vlaneseq
    %v2659 = vshrl.u32 %v2658, 7
    %v2660 = vsub.s32 %v2605, %v2659
    %v2661 = vrot.slane %v2581, %v2660
    %v2662 = vlaneseq
    %v2663 = vshrl.u32 %v2662, 7
    %v2664 = vsub.s32 %v2605, %v2663
    %v2665 = vrot.slane %v2582, %v2664
    %v2666 = vlaneseq
    %v2667 = vshrl.u32 %v2666, 7
    %v2668 = vsub.s32 %v2605, %v2667
    %v2669 = vrot.slane %v2583, %v2668
    %vm2670 = vcmask 1041409
    %v2671 = vsel %vm2670, %v2613, %v2609
    %vm2672 = vcmask 1042434
    %v2673 = vsel %vm2672, %v2617, %v2671
    %vm2674 = vcmask 1043459
    %v2675 = vsel %vm2674, %v2621, %v2673
    %vm2676 = vcmask 1044484
    %v2677 = vsel %vm2676, %v2625, %v2675
    %vm2678 = vcmask 1045509
    %v2679 = vsel %vm2678, %v2629, %v2677
    %vm2680 = vcmask 1046534
    %v2681 = vsel %vm2680, %v2633, %v2679
    %vm2682 = vcmask 1047559
    %v2683 = vsel %vm2682, %v2637, %v2681
    %v2684 = vsel %vm2670, %v2645, %v2641
    %v2685 = vsel %vm2672, %v2649, %v2684
    %v2686 = vsel %vm2674, %v2653, %v2685
    %v2687 = vsel %vm2676, %v2657, %v2686
    %v2688 = vsel %vm2678, %v2661, %v2687
    %v2689 = vsel %vm2680, %v2665, %v2688
    %v2690 = vsel %vm2682, %v2669, %v2689
    %v2693 = vsel %vm2586, -inf, %v2683
    %v2694 = vsel %vm2587, -inf, %v2690
    %vm2695 = vcmask 64512
    %v2696 = vsel %vm2695, %v2693, -inf
    %2697 = vmax.xlane.f32.xlu0 %v2696
    %v2698 = vpop.xlane.xlu0 %2697
    %v2699 = vsel %vm2695, %v2694, -inf
    %2700 = vmax.xlane.f32.xlu0 %v2699
    %v2701 = vpop.xlane.xlu0 %2700
    %v2702 = vsub.f32 %v2693, %v2698
    %v2703 = vsub.f32 %v2694, %v2701
    %v2704 = vmul.f32 %v2702, 1.442695
    %v2705 = vpow.pop %v2704
    %v2706 = vmul.f32 %v2703, 1.442695
    %v2707 = vpow.pop %v2706
    %v2708 = vsel %vm2695, %v2705, 0.0
    %2709 = vadd.xlane.f32.xlu0 %v2708
    %v2710 = vpop.xlane.xlu0 %2709
    %v2711 = vsel %vm2695, %v2707, 0.0
    %2712 = vadd.xlane.f32.xlu0 %v2711
    %v2713 = vpop.xlane.xlu0 %2712
    %v2714 = vrcp.pop %v2710
    %v2715 = vrcp.pop %v2713
    %v2716 = vmul.f32 %v2705, %v2714
    %v2717 = vmul.f32 %v2707, %v2715
    %2718 = vst.msk [vmem:[%s4] sm:$0xff] %vm2695, %v2716
    %2719 = vst.msk [vmem:[%s4 + $0x8] sm:$0xff] %vm2695, %v2717
    // Predicated region
    $region30: #{tpu_custom_call.1} parent=1 // pred_check
      _
    $region31: #{tpu_custom_call.1} parent=1 // pred_check_branch
      %2721 = sbr.rel (0) target = $region33
    $region32: #{tpu_custom_call.1} parent=1 // pred_region
      _
    $region33: #{tpu_custom_call.1} parent=1 // pred_fallthru
      _
    // Predicated region
    $region34: #{tpu_custom_call.1} parent=1 // pred_check
      _
    $region35: #{tpu_custom_call.1} parent=1 // pred_check_branch
      %2723 = sbr.rel (0) target = $region37
    $region36: #{tpu_custom_call.1} parent=1 // pred_region
      _
    $region37: #{tpu_custom_call.1} parent=1 // pred_fallthru
      _
    %2724 = vsyncpa [#allocation3], 1
    %2725 = vsyncpa [#allocation5], 1

</llo_original>
